<compile_context>
chip_gen: v7x
topology: tpu7x:2x2x1
jax: 0.10.0
libtpu: 0.0.40
codegen_flags: <defaults>
</compile_context>

<pallas_src>
import functools

import jax
import jax.numpy as jnp
from jax import lax
from jax.experimental import pallas as pl
from jax.experimental.pallas import tpu as pltpu


def _round_up(x, m):
    return ((x + m - 1) // m) * m


_COMPILER_PARAMS = pltpu.CompilerParams(
    dimension_semantics=("parallel",),
    vmem_limit_bytes=32 << 20,
)


# ----------------------------------------------------------------------------
# Pallas kernels
# ----------------------------------------------------------------------------
def _matmul_act_kernel(p_ref, w_ref, o_ref, *, apply_act, neg_slope=0.2):
    # (TM, Kp) @ (Kp, Np) on the MXU, f32 accumulation, optional LeakyReLU.
    acc = jnp.dot(p_ref[...], w_ref[...], preferred_element_type=jnp.float32)
    if apply_act:
        acc = jnp.where(acc >= 0, acc, neg_slope * acc)
    o_ref[...] = acc


def _matmul_stats_kernel(p_ref, w_ref, o_ref, psum_ref, psq_ref):
    # Matmul tile + per-tile per-channel partial sum / sum-of-squares
    # (single pass; var is finished outside as E[x^2]-E[x]^2).
    acc = jnp.dot(p_ref[...], w_ref[...], preferred_element_type=jnp.float32)
    o_ref[...] = acc
    s = jnp.sum(acc, axis=0, keepdims=True)            # (1, Np)  XLU reduce
    sq = jnp.sum(acc * acc, axis=0, keepdims=True)     # (1, Np)
    psum_ref[0] = jnp.broadcast_to(s, psum_ref.shape[1:])
    psq_ref[0] = jnp.broadcast_to(sq, psq_ref.shape[1:])


def _affine_act_kernel(x_ref, scale_ref, shift_ref, o_ref, *, apply_act,
                       neg_slope=0.2):
    # Folded BatchNorm: y = x*scale + shift, then optional LeakyReLU.
    y = x_ref[...] * scale_ref[...] + shift_ref[...]
    if apply_act:
        y = jnp.where(y >= 0, y, neg_slope * y)
    o_ref[...] = y


# ----------------------------------------------------------------------------
# pallas_call wrappers (M-tiled grid, lane-dense padded N)
# ----------------------------------------------------------------------------
def _matmul_call(p_pad, w_pad, tm, *, with_stats, apply_act):
    mp, kp = p_pad.shape
    _, np_ = w_pad.shape
    grid = (mp // tm,)
    cost = pl.CostEstimate(
        flops=2 * mp * kp * np_,
        transcendentals=0,
        bytes_accessed=(mp * kp * p_pad.dtype.itemsize
                        + kp * np_ * w_pad.dtype.itemsize
                        + mp * np_ * 4),
    )
    in_specs = [
        pl.BlockSpec((tm, kp), lambda i: (i, 0)),   # patches tile
        pl.BlockSpec((kp, np_), lambda i: (0, 0)),  # weights stay resident
    ]
    if with_stats:
        out_shape = (
            jax.ShapeDtypeStruct((mp, np_), jnp.float32),
            jax.ShapeDtypeStruct((grid[0], 8, np_), jnp.float32),
            jax.ShapeDtypeStruct((grid[0], 8, np_), jnp.float32),
        )
        out_specs = (
            pl.BlockSpec((tm, np_), lambda i: (i, 0)),
            pl.BlockSpec((1, 8, np_), lambda i: (i, 0, 0)),
            pl.BlockSpec((1, 8, np_), lambda i: (i, 0, 0)),
        )
        kernel = _matmul_stats_kernel
    else:
        out_shape = jax.ShapeDtypeStruct((mp, np_), jnp.float32)
        out_specs = pl.BlockSpec((tm, np_), lambda i: (i, 0))
        kernel = functools.partial(_matmul_act_kernel, apply_act=apply_act)
    return pl.pallas_call(
        kernel,
        out_shape=out_shape,
        grid=grid,
        in_specs=in_specs,
        out_specs=out_specs,
        compiler_params=_COMPILER_PARAMS,
        cost_estimate=cost,
    )(p_pad, w_pad)


def _affine_act_call(x_pad, scale_row, shift_row, tm, *, apply_act):
    mp, np_ = x_pad.shape
    grid = (mp // tm,)
    return pl.pallas_call(
        functools.partial(_affine_act_kernel, apply_act=apply_act),
        out_shape=jax.ShapeDtypeStruct((mp, np_), jnp.float32),
        grid=grid,
        in_specs=[
            pl.BlockSpec((tm, np_), lambda i: (i, 0)),
            pl.BlockSpec((1, np_), lambda i: (0, 0)),
            pl.BlockSpec((1, np_), lambda i: (0, 0)),
        ],
        out_specs=pl.BlockSpec((tm, np_), lambda i: (i, 0)),
        compiler_params=_COMPILER_PARAMS,
    )(x_pad, scale_row, shift_row)


# ----------------------------------------------------------------------------
# Plain-JAX glue: NHWC im2col + layer wrapper
# ----------------------------------------------------------------------------
def _im2col_nhwc(x, kh, kw, stride, pad):
    B, H, W, C = x.shape
    if pad:
        x = jnp.pad(x, ((0, 0), (pad, pad), (pad, pad), (0, 0)))
    Hp, Wp = H + 2 * pad, W + 2 * pad
    Ho = (Hp - kh) // stride + 1
    Wo = (Wp - kw) // stride + 1
    cols = []
    for di in range(kh):
        for dj in range(kw):
            cols.append(x[:, di:di + stride * Ho:stride,
                          dj:dj + stride * Wo:stride, :])
    p = jnp.stack(cols, axis=3)                       # (B, Ho, Wo, kh*kw, C)
    return p.reshape(B * Ho * Wo, kh * kw * C), Ho, Wo


def _conv_layer(x_nhwc, w_oihw, *, stride, pad, gamma=None, beta=None,
                apply_act=True, eps=1e-5, tm_max=512):
    B = x_nhwc.shape[0]
    Cout, Cin, kh, kw = w_oihw.shape
    patches, Ho, Wo = _im2col_nhwc(x_nhwc, kh, kw, stride, pad)
    M, K = patches.shape
    # weight rows ordered as (di, dj, c) to match the patch layout
    w_kn = w_oihw.transpose(2, 3, 1, 0).reshape(K, Cout)

    # Lane/sublane-friendly padding: K, N -> mult. of 128; M -> mult. of tile.
    Kp = _round_up(K, 128)
    Np = _round_up(Cout, 128)
    tm = min(tm_max, _round_up(M, 8))
    Mp = _round_up(M, tm)

    p_pad = jnp.pad(patches.astype(jnp.bfloat16), ((0, Mp - M), (0, Kp - K)))
    w_pad = jnp.pad(w_kn.astype(jnp.bfloat16), ((0, Kp - K), (0, Np - Cout)))

    if gamma is None:
        out_pad = _matmul_call(p_pad, w_pad, tm,
                               with_stats=False, apply_act=apply_act)
    else:
        out_pad, psum, psq = _matmul_call(p_pad, w_pad, tm,
                                          with_stats=True, apply_act=False)
        # Finish BN stats over the true M rows (padded rows are exact zeros).
        tot = jnp.sum(psum[:, 0, :], axis=0)
        tot_sq = jnp.sum(psq[:, 0, :], axis=0)
        mean = tot / M
        var = jnp.maximum(tot_sq / M - mean * mean, 0.0)
        g = jnp.pad(gamma.astype(jnp.float32), (0, Np - Cout))
        b = jnp.pad(beta.astype(jnp.float32), (0, Np - Cout))
        scale = g * lax.rsqrt(var + eps)
        shift = b - mean * scale
        out_pad = _affine_act_call(out_pad, scale.reshape(1, Np),
                                   shift.reshape(1, Np), tm,
                                   apply_act=apply_act)

    return out_pad[:M, :Cout].reshape(B, Ho, Wo, Cout)


# ----------------------------------------------------------------------------
# Encoder: parameter init + forward
# ----------------------------------------------------------------------------
def init_encoder_params(key, im_chan, z_dim, hidden_dim):
    k1, k2, k3, k4 = jax.random.split(key, 4)

    def w(k, cout, cin, ks):
        return 0.05 * jax.random.normal(k, (cout, cin, ks, ks), jnp.float32)

    return {
        "w1": w(k1, hidden_dim, im_chan, 4),
        "w2": w(k2, hidden_dim * 2, hidden_dim, 4),
        "g2": jnp.ones((hidden_dim * 2,), jnp.float32),
        "b2": jnp.zeros((hidden_dim * 2,), jnp.float32),
        "w3": w(k3, hidden_dim * 4, hidden_dim * 2, 3),
        "g3": jnp.ones((hidden_dim * 4,), jnp.float32),
        "b3": jnp.zeros((hidden_dim * 4,), jnp.float32),
        "w4": w(k4, z_dim, hidden_dim * 4, 3),
    }


def encoder_forward(params, image_nchw):
    x = jnp.transpose(image_nchw, (0, 2, 3, 1))      # NCHW -> NHWC once
    x = _conv_layer(x, params["w1"], stride=2, pad=1, apply_act=True)
    x = _conv_layer(x, params["w2"], stride=2, pad=1,
                    gamma=params["g2"], beta=params["b2"], apply_act=True)
    x = _conv_layer(x, params["w3"], stride=2, pad=0,
                    gamma=params["g3"], beta=params["b3"], apply_act=True)
    x = _conv_layer(x, params["w4"], stride=1, pad=0, apply_act=False)
    return jnp.transpose(x, (0, 3, 1, 2))            # NHWC -> NCHW (PyTorch)


# ----------------------------------------------------------------------------
# Pure-JAX f32 reference (silent correctness check)
# ----------------------------------------------------------------------------
def _ref_conv(x, w, stride, pad):
    return lax.conv_general_dilated(x, w, (stride, stride),
                                    [(pad, pad), (pad, pad)],
                                    dimension_numbers=("NCHW", "OIHW", "NCHW"))


def _ref_bn(x, gamma, beta, eps=1e-5):
    mean = jnp.mean(x, axis=(0, 2, 3), keepdims=True)
    var = jnp.mean((x - mean) ** 2, axis=(0, 2, 3), keepdims=True)
    xn = (x - mean) * lax.rsqrt(var + eps)
    return xn * gamma[None, :, None, None] + beta[None, :, None, None]


def _ref_lrelu(x, a=0.2):
    return jnp.where(x >= 0, x, a * x)


def ref_forward(params, image):
    x = _ref_lrelu(_ref_conv(image, params["w1"], 2, 1))
    x = _ref_lrelu(_ref_bn(_ref_conv(x, params["w2"], 2, 1),
                           params["g2"], params["b2"]))
    x = _ref_lrelu(_ref_bn(_ref_conv(x, params["w3"], 2, 0),
                           params["g3"], params["b3"]))
    x = _ref_conv(x, params["w4"], 1, 0)
    return x


if __name__ == "__main__":
    B, IM_CHAN, H, W = 2, 3, 32, 32
    HIDDEN, Z_DIM = 8, 16

    key = jax.random.PRNGKey(0)
    k_p, k_x = jax.random.split(key)
    params = init_encoder_params(k_p, IM_CHAN, Z_DIM, HIDDEN)
    image = jax.random.normal(k_x, (B, IM_CHAN, H, W), jnp.float32)  # NCHW

    out = jax.jit(encoder_forward)(params, image)
    out = jax.block_until_ready(out)

    assert out.shape == (B, Z_DIM, 1, 1), out.shape

    # Tolerance loosened vs an f32 reference because MXU inputs are bf16
    # (accumulation stays f32).  Structural bugs produce O(1) errors.
    ref = ref_forward(params, image)
    assert jnp.allclose(out, ref, atol=1e-1, rtol=1e-1), \
        float(jnp.max(jnp.abs(out - ref)))

    print("KERNEL_OK")
</pallas_src>

<mosaic_0001>
module attributes {stable_mosaic.version = 11 : i64} {
  func.func @_matmul_act_kernel(%arg0: i32, %arg1: memref<512x128xbf16, #tpu.memory_space<vmem>>, %arg2: memref<128x128xbf16, #tpu.memory_space<vmem>>, %arg3: memref<512x128xf32, #tpu.memory_space<vmem>>) attributes {dimension_semantics = [#tpu.dimension_semantics<parallel>], iteration_bounds = array<i64: 1>, scalar_prefetch = 0 : i64, scratch_operands = 0 : i64, tpu.core_type = #tpu.core_type<tc>, window_params = [{transform_indices = @transform_0, window_bounds = array<i64: 512, 128>}, {pipeline_mode = #tpu.pipeline_mode<synchronous>, transform_indices = @transform_1, window_bounds = array<i64: 128, 128>}, {transform_indices = @transform_2, window_bounds = array<i64: 512, 128>}]} {
    %c0 = arith.constant 0 : index
    %c0_0 = arith.constant 0 : index
    %0 = vector.load %arg1[%c0, %c0_0] : memref<512x128xbf16, #tpu.memory_space<vmem>>, vector<512x128xbf16>
    %c0_1 = arith.constant 0 : index
    %c0_2 = arith.constant 0 : index
    %1 = vector.load %arg2[%c0_1, %c0_2] : memref<128x128xbf16, #tpu.memory_space<vmem>>, vector<128x128xbf16>
    %cst = arith.constant dense<0.000000e+00> : vector<512x128xf32>
    %2 = tpu.matmul %0, %1, %cst {dimension_numbers = #tpu.dot_dimension_numbers<[1], [0], [0], [1], [0, 0, 1, 1], [], []>} : vector<512x128xbf16>, vector<128x128xbf16>, vector<512x128xf32> -> vector<512x128xf32>
    %cst_3 = arith.constant 0.000000e+00 : f32
    %3 = vector.broadcast %cst_3 : f32 to vector<512x128xf32>
    %4 = arith.cmpf oge, %2, %3 : vector<512x128xf32>
    %cst_4 = arith.constant 2.000000e-01 : f32
    %5 = vector.broadcast %cst_4 : f32 to vector<512x128xf32>
    %6 = arith.mulf %5, %2 : vector<512x128xf32>
    %7 = arith.select %4, %2, %6 : vector<512x128xi1>, vector<512x128xf32>
    %c0_5 = arith.constant 0 : index
    %c0_6 = arith.constant 0 : index
    %8 = vector.load %arg3[%c0_5, %c0_6] : memref<512x128xf32, #tpu.memory_space<vmem>>, vector<512x128xf32>
    tpu.vector_store %arg3[%c0_5, %c0_6], %7 {strides = array<i32>} : memref<512x128xf32, #tpu.memory_space<vmem>>, vector<512x128xf32>,
    return
  }
  func.func @transform_0(%arg0: i32) -> (i32, i32) {
    %c0_i32 = arith.constant 0 : i32
    %c0_i32_0 = arith.constant 0 : i32
    return %arg0, %c0_i32 : i32, i32
  }
  func.func @transform_1(%arg0: i32) -> (i32, i32) {
    %c0_i32 = arith.constant 0 : i32
    %c0_i32_0 = arith.constant 0 : i32
    %c0_i32_1 = arith.constant 0 : i32
    return %c0_i32, %c0_i32_0 : i32, i32
  }
  func.func @transform_2(%arg0: i32) -> (i32, i32) {
    %c0_i32 = arith.constant 0 : i32
    %c0_i32_0 = arith.constant 0 : i32
    return %arg0, %c0_i32 : i32, i32
  }
}

module attributes {stable_mosaic.version = 11 : i64} {
  func.func @_matmul_stats_kernel(%arg0: i32, %arg1: memref<128x128xbf16, #tpu.memory_space<vmem>>, %arg2: memref<128x128xbf16, #tpu.memory_space<vmem>>, %arg3: memref<128x128xf32, #tpu.memory_space<vmem>>, %arg4: memref<1x8x128xf32, #tpu.memory_space<vmem>>, %arg5: memref<1x8x128xf32, #tpu.memory_space<vmem>>) attributes {dimension_semantics = [#tpu.dimension_semantics<parallel>], iteration_bounds = array<i64: 1>, scalar_prefetch = 0 : i64, scratch_operands = 0 : i64, tpu.core_type = #tpu.core_type<tc>, window_params = [{transform_indices = @transform_0, window_bounds = array<i64: 128, 128>}, {pipeline_mode = #tpu.pipeline_mode<synchronous>, transform_indices = @transform_1, window_bounds = array<i64: 128, 128>}, {transform_indices = @transform_2, window_bounds = array<i64: 128, 128>}, {transform_indices = @transform_3, window_bounds = array<i64: 1, 8, 128>}, {transform_indices = @transform_4, window_bounds = array<i64: 1, 8, 128>}]} {
    %c0 = arith.constant 0 : index
    %c0_0 = arith.constant 0 : index
    %0 = vector.load %arg1[%c0, %c0_0] : memref<128x128xbf16, #tpu.memory_space<vmem>>, vector<128x128xbf16>
    %c0_1 = arith.constant 0 : index
    %c0_2 = arith.constant 0 : index
    %1 = vector.load %arg2[%c0_1, %c0_2] : memref<128x128xbf16, #tpu.memory_space<vmem>>, vector<128x128xbf16>
    %cst = arith.constant dense<0.000000e+00> : vector<128x128xf32>
    %2 = tpu.matmul %0, %1, %cst {dimension_numbers = #tpu.dot_dimension_numbers<[1], [0], [0], [1], [0, 0, 1, 1], [], []>} : vector<128x128xbf16>, vector<128x128xbf16>, vector<128x128xf32> -> vector<128x128xf32>
    %c0_3 = arith.constant 0 : index
    %c0_4 = arith.constant 0 : index
    %3 = vector.load %arg3[%c0_3, %c0_4] : memref<128x128xf32, #tpu.memory_space<vmem>>, vector<128x128xf32>
    tpu.vector_store %arg3[%c0_3, %c0_4], %2 {strides = array<i32>} : memref<128x128xf32, #tpu.memory_space<vmem>>, vector<128x128xf32>,
    %cst_5 = arith.constant dense<0.000000e+00> : vector<128xf32>
    %4 = vector.multi_reduction <add>, %2, %cst_5 [0] : vector<128x128xf32> to vector<128xf32>
    %5 = vector.shape_cast %4 : vector<128xf32> to vector<1x128xf32>
    %6 = arith.mulf %2, %2 : vector<128x128xf32>
    %cst_6 = arith.constant dense<0.000000e+00> : vector<128xf32>
    %7 = vector.multi_reduction <add>, %6, %cst_6 [0] : vector<128x128xf32> to vector<128xf32>
    %8 = vector.shape_cast %7 : vector<128xf32> to vector<1x128xf32>
    %9 = vector.shape_cast %5 : vector<1x128xf32> to vector<1x128xf32>
    %10 = vector.broadcast %9 : vector<1x128xf32> to vector<8x128xf32>
    %c0_7 = arith.constant 0 : index
    %c0_8 = arith.constant 0 : index
    %c0_9 = arith.constant 0 : index
    %11 = vector.load %arg4[%c0_7, %c0_8, %c0_9] : memref<1x8x128xf32, #tpu.memory_space<vmem>>, vector<1x8x128xf32>
    %12 = vector.shape_cast %11 : vector<1x8x128xf32> to vector<8x128xf32>
    %13 = vector.shape_cast %10 : vector<8x128xf32> to vector<1x8x128xf32>
    tpu.vector_store %arg4[%c0_7, %c0_8, %c0_9], %13 {strides = array<i32>} : memref<1x8x128xf32, #tpu.memory_space<vmem>>, vector<1x8x128xf32>,
    %14 = vector.shape_cast %8 : vector<1x128xf32> to vector<1x128xf32>
    %15 = vector.broadcast %14 : vector<1x128xf32> to vector<8x128xf32>
    %c0_10 = arith.constant 0 : index
    %c0_11 = arith.constant 0 : index
    %c0_12 = arith.constant 0 : index
    %16 = vector.load %arg5[%c0_10, %c0_11, %c0_12] : memref<1x8x128xf32, #tpu.memory_space<vmem>>, vector<1x8x128xf32>
    %17 = vector.shape_cast %16 : vector<1x8x128xf32> to vector<8x128xf32>
    %18 = vector.shape_cast %15 : vector<8x128xf32> to vector<1x8x128xf32>
    tpu.vector_store %arg5[%c0_10, %c0_11, %c0_12], %18 {strides = array<i32>} : memref<1x8x128xf32, #tpu.memory_space<vmem>>, vector<1x8x128xf32>,
    return
  }
  func.func @transform_0(%arg0: i32) -> (i32, i32) {
    %c0_i32 = arith.constant 0 : i32
    %c0_i32_0 = arith.constant 0 : i32
    return %arg0, %c0_i32 : i32, i32
  }
  func.func @transform_1(%arg0: i32) -> (i32, i32) {
    %c0_i32 = arith.constant 0 : i32
    %c0_i32_0 = arith.constant 0 : i32
    %c0_i32_1 = arith.constant 0 : i32
    return %c0_i32, %c0_i32_0 : i32, i32
  }
  func.func @transform_2(%arg0: i32) -> (i32, i32) {
    %c0_i32 = arith.constant 0 : i32
    %c0_i32_0 = arith.constant 0 : i32
    return %arg0, %c0_i32 : i32, i32
  }
  func.func @transform_3(%arg0: i32) -> (i32, i32, i32) {
    %c0_i32 = arith.constant 0 : i32
    %c0_i32_0 = arith.constant 0 : i32
    %c0_i32_1 = arith.constant 0 : i32
    return %arg0, %c0_i32, %c0_i32_0 : i32, i32, i32
  }
  func.func @transform_4(%arg0: i32) -> (i32, i32, i32) {
    %c0_i32 = arith.constant 0 : i32
    %c0_i32_0 = arith.constant 0 : i32
    %c0_i32_1 = arith.constant 0 : i32
    return %arg0, %c0_i32, %c0_i32_0 : i32, i32, i32
  }
}

module attributes {stable_mosaic.version = 11 : i64} {
  func.func @_affine_act_kernel(%arg0: i32, %arg1: memref<128x128xf32, #tpu.memory_space<vmem>>, %arg2: memref<1x128xf32, #tpu.memory_space<vmem>>, %arg3: memref<1x128xf32, #tpu.memory_space<vmem>>, %arg4: memref<128x128xf32, #tpu.memory_space<vmem>>) attributes {dimension_semantics = [#tpu.dimension_semantics<parallel>], iteration_bounds = array<i64: 1>, scalar_prefetch = 0 : i64, scratch_operands = 0 : i64, tpu.core_type = #tpu.core_type<tc>, window_params = [{transform_indices = @transform_0, window_bounds = array<i64: 128, 128>}, {pipeline_mode = #tpu.pipeline_mode<synchronous>, transform_indices = @transform_1, window_bounds = array<i64: 1, 128>}, {pipeline_mode = #tpu.pipeline_mode<synchronous>, transform_indices = @transform_2, window_bounds = array<i64: 1, 128>}, {transform_indices = @transform_3, window_bounds = array<i64: 128, 128>}]} {
    %c0 = arith.constant 0 : index
    %c0_0 = arith.constant 0 : index
    %0 = vector.load %arg1[%c0, %c0_0] : memref<128x128xf32, #tpu.memory_space<vmem>>, vector<128x128xf32>
    %c0_1 = arith.constant 0 : index
    %c0_2 = arith.constant 0 : index
    %1 = vector.load %arg2[%c0_1, %c0_2] : memref<1x128xf32, #tpu.memory_space<vmem>>, vector<1x128xf32>
    %2 = vector.broadcast %1 : vector<1x128xf32> to vector<128x128xf32>
    %3 = arith.mulf %0, %2 : vector<128x128xf32>
    %c0_3 = arith.constant 0 : index
    %c0_4 = arith.constant 0 : index
    %4 = vector.load %arg3[%c0_3, %c0_4] : memref<1x128xf32, #tpu.memory_space<vmem>>, vector<1x128xf32>
    %5 = vector.broadcast %4 : vector<1x128xf32> to vector<128x128xf32>
    %6 = arith.addf %3, %5 : vector<128x128xf32>
    %cst = arith.constant 0.000000e+00 : f32
    %7 = vector.broadcast %cst : f32 to vector<128x128xf32>
    %8 = arith.cmpf oge, %6, %7 : vector<128x128xf32>
    %cst_5 = arith.constant 2.000000e-01 : f32
    %9 = vector.broadcast %cst_5 : f32 to vector<128x128xf32>
    %10 = arith.mulf %9, %6 : vector<128x128xf32>
    %11 = arith.select %8, %6, %10 : vector<128x128xi1>, vector<128x128xf32>
    %c0_6 = arith.constant 0 : index
    %c0_7 = arith.constant 0 : index
    %12 = vector.load %arg4[%c0_6, %c0_7] : memref<128x128xf32, #tpu.memory_space<vmem>>, vector<128x128xf32>
    tpu.vector_store %arg4[%c0_6, %c0_7], %11 {strides = array<i32>} : memref<128x128xf32, #tpu.memory_space<vmem>>, vector<128x128xf32>,
    return
  }
  func.func @transform_0(%arg0: i32) -> (i32, i32) {
    %c0_i32 = arith.constant 0 : i32
    %c0_i32_0 = arith.constant 0 : i32
    return %arg0, %c0_i32 : i32, i32
  }
  func.func @transform_1(%arg0: i32) -> (i32, i32) {
    %c0_i32 = arith.constant 0 : i32
    %c0_i32_0 = arith.constant 0 : i32
    %c0_i32_1 = arith.constant 0 : i32
    return %c0_i32, %c0_i32_0 : i32, i32
  }
  func.func @transform_2(%arg0: i32) -> (i32, i32) {
    %c0_i32 = arith.constant 0 : i32
    %c0_i32_0 = arith.constant 0 : i32
    %c0_i32_1 = arith.constant 0 : i32
    return %c0_i32, %c0_i32_0 : i32, i32
  }
  func.func @transform_3(%arg0: i32) -> (i32, i32) {
    %c0_i32 = arith.constant 0 : i32
    %c0_i32_0 = arith.constant 0 : i32
    return %arg0, %c0_i32 : i32, i32
  }
}

module attributes {stable_mosaic.version = 11 : i64} {
  func.func @_matmul_stats_kernel(%arg0: i32, %arg1: memref<24x256xbf16, #tpu.memory_space<vmem>>, %arg2: memref<256x128xbf16, #tpu.memory_space<vmem>>, %arg3: memref<24x128xf32, #tpu.memory_space<vmem>>, %arg4: memref<1x8x128xf32, #tpu.memory_space<vmem>>, %arg5: memref<1x8x128xf32, #tpu.memory_space<vmem>>) attributes {dimension_semantics = [#tpu.dimension_semantics<parallel>], iteration_bounds = array<i64: 1>, scalar_prefetch = 0 : i64, scratch_operands = 0 : i64, tpu.core_type = #tpu.core_type<tc>, window_params = [{transform_indices = @transform_0, window_bounds = array<i64: 24, 256>}, {pipeline_mode = #tpu.pipeline_mode<synchronous>, transform_indices = @transform_1, window_bounds = array<i64: 256, 128>}, {transform_indices = @transform_2, window_bounds = array<i64: 24, 128>}, {transform_indices = @transform_3, window_bounds = array<i64: 1, 8, 128>}, {transform_indices = @transform_4, window_bounds = array<i64: 1, 8, 128>}]} {
    %c0 = arith.constant 0 : index
    %c0_0 = arith.constant 0 : index
    %0 = vector.load %arg1[%c0, %c0_0] : memref<24x256xbf16, #tpu.memory_space<vmem>>, vector<24x256xbf16>
    %c0_1 = arith.constant 0 : index
    %c0_2 = arith.constant 0 : index
    %1 = vector.load %arg2[%c0_1, %c0_2] : memref<256x128xbf16, #tpu.memory_space<vmem>>, vector<256x128xbf16>
    %cst = arith.constant dense<0.000000e+00> : vector<24x128xf32>
    %2 = tpu.matmul %0, %1, %cst {dimension_numbers = #tpu.dot_dimension_numbers<[1], [0], [0], [1], [0, 0, 1, 1], [], []>} : vector<24x256xbf16>, vector<256x128xbf16>, vector<24x128xf32> -> vector<24x128xf32>
    %c0_3 = arith.constant 0 : index
    %c0_4 = arith.constant 0 : index
    %3 = vector.load %arg3[%c0_3, %c0_4] : memref<24x128xf32, #tpu.memory_space<vmem>>, vector<24x128xf32>
    tpu.vector_store %arg3[%c0_3, %c0_4], %2 {strides = array<i32>} : memref<24x128xf32, #tpu.memory_space<vmem>>, vector<24x128xf32>,
    %cst_5 = arith.constant dense<0.000000e+00> : vector<128xf32>
    %4 = vector.multi_reduction <add>, %2, %cst_5 [0] : vector<24x128xf32> to vector<128xf32>
    %5 = vector.shape_cast %4 : vector<128xf32> to vector<1x128xf32>
    %6 = arith.mulf %2, %2 : vector<24x128xf32>
    %cst_6 = arith.constant dense<0.000000e+00> : vector<128xf32>
    %7 = vector.multi_reduction <add>, %6, %cst_6 [0] : vector<24x128xf32> to vector<128xf32>
    %8 = vector.shape_cast %7 : vector<128xf32> to vector<1x128xf32>
    %9 = vector.shape_cast %5 : vector<1x128xf32> to vector<1x128xf32>
    %10 = vector.broadcast %9 : vector<1x128xf32> to vector<8x128xf32>
    %c0_7 = arith.constant 0 : index
    %c0_8 = arith.constant 0 : index
    %c0_9 = arith.constant 0 : index
    %11 = vector.load %arg4[%c0_7, %c0_8, %c0_9] : memref<1x8x128xf32, #tpu.memory_space<vmem>>, vector<1x8x128xf32>
    %12 = vector.shape_cast %11 : vector<1x8x128xf32> to vector<8x128xf32>
    %13 = vector.shape_cast %10 : vector<8x128xf32> to vector<1x8x128xf32>
    tpu.vector_store %arg4[%c0_7, %c0_8, %c0_9], %13 {strides = array<i32>} : memref<1x8x128xf32, #tpu.memory_space<vmem>>, vector<1x8x128xf32>,
    %14 = vector.shape_cast %8 : vector<1x128xf32> to vector<1x128xf32>
    %15 = vector.broadcast %14 : vector<1x128xf32> to vector<8x128xf32>
    %c0_10 = arith.constant 0 : index
    %c0_11 = arith.constant 0 : index
    %c0_12 = arith.constant 0 : index
    %16 = vector.load %arg5[%c0_10, %c0_11, %c0_12] : memref<1x8x128xf32, #tpu.memory_space<vmem>>, vector<1x8x128xf32>
    %17 = vector.shape_cast %16 : vector<1x8x128xf32> to vector<8x128xf32>
    %18 = vector.shape_cast %15 : vector<8x128xf32> to vector<1x8x128xf32>
    tpu.vector_store %arg5[%c0_10, %c0_11, %c0_12], %18 {strides = array<i32>} : memref<1x8x128xf32, #tpu.memory_space<vmem>>, vector<1x8x128xf32>,
    return
  }
  func.func @transform_0(%arg0: i32) -> (i32, i32) {
    %c0_i32 = arith.constant 0 : i32
    %c0_i32_0 = arith.constant 0 : i32
    return %arg0, %c0_i32 : i32, i32
  }
  func.func @transform_1(%arg0: i32) -> (i32, i32) {
    %c0_i32 = arith.constant 0 : i32
    %c0_i32_0 = arith.constant 0 : i32
    %c0_i32_1 = arith.constant 0 : i32
    return %c0_i32, %c0_i32_0 : i32, i32
  }
  func.func @transform_2(%arg0: i32) -> (i32, i32) {
    %c0_i32 = arith.constant 0 : i32
    %c0_i32_0 = arith.constant 0 : i32
    return %arg0, %c0_i32 : i32, i32
  }
  func.func @transform_3(%arg0: i32) -> (i32, i32, i32) {
    %c0_i32 = arith.constant 0 : i32
    %c0_i32_0 = arith.constant 0 : i32
    %c0_i32_1 = arith.constant 0 : i32
    return %arg0, %c0_i32, %c0_i32_0 : i32, i32, i32
  }
  func.func @transform_4(%arg0: i32) -> (i32, i32, i32) {
    %c0_i32 = arith.constant 0 : i32
    %c0_i32_0 = arith.constant 0 : i32
    %c0_i32_1 = arith.constant 0 : i32
    return %arg0, %c0_i32, %c0_i32_0 : i32, i32, i32
  }
}

module attributes {stable_mosaic.version = 11 : i64} {
  func.func @_affine_act_kernel(%arg0: i32, %arg1: memref<24x128xf32, #tpu.memory_space<vmem>>, %arg2: memref<1x128xf32, #tpu.memory_space<vmem>>, %arg3: memref<1x128xf32, #tpu.memory_space<vmem>>, %arg4: memref<24x128xf32, #tpu.memory_space<vmem>>) attributes {dimension_semantics = [#tpu.dimension_semantics<parallel>], iteration_bounds = array<i64: 1>, scalar_prefetch = 0 : i64, scratch_operands = 0 : i64, tpu.core_type = #tpu.core_type<tc>, window_params = [{transform_indices = @transform_0, window_bounds = array<i64: 24, 128>}, {pipeline_mode = #tpu.pipeline_mode<synchronous>, transform_indices = @transform_1, window_bounds = array<i64: 1, 128>}, {pipeline_mode = #tpu.pipeline_mode<synchronous>, transform_indices = @transform_2, window_bounds = array<i64: 1, 128>}, {transform_indices = @transform_3, window_bounds = array<i64: 24, 128>}]} {
    %c0 = arith.constant 0 : index
    %c0_0 = arith.constant 0 : index
    %0 = vector.load %arg1[%c0, %c0_0] : memref<24x128xf32, #tpu.memory_space<vmem>>, vector<24x128xf32>
    %c0_1 = arith.constant 0 : index
    %c0_2 = arith.constant 0 : index
    %1 = vector.load %arg2[%c0_1, %c0_2] : memref<1x128xf32, #tpu.memory_space<vmem>>, vector<1x128xf32>
    %2 = vector.broadcast %1 : vector<1x128xf32> to vector<24x128xf32>
    %3 = arith.mulf %0, %2 : vector<24x128xf32>
    %c0_3 = arith.constant 0 : index
    %c0_4 = arith.constant 0 : index
    %4 = vector.load %arg3[%c0_3, %c0_4] : memref<1x128xf32, #tpu.memory_space<vmem>>, vector<1x128xf32>
    %5 = vector.broadcast %4 : vector<1x128xf32> to vector<24x128xf32>
    %6 = arith.addf %3, %5 : vector<24x128xf32>
    %cst = arith.constant 0.000000e+00 : f32
    %7 = vector.broadcast %cst : f32 to vector<24x128xf32>
    %8 = arith.cmpf oge, %6, %7 : vector<24x128xf32>
    %cst_5 = arith.constant 2.000000e-01 : f32
    %9 = vector.broadcast %cst_5 : f32 to vector<24x128xf32>
    %10 = arith.mulf %9, %6 : vector<24x128xf32>
    %11 = arith.select %8, %6, %10 : vector<24x128xi1>, vector<24x128xf32>
    %c0_6 = arith.constant 0 : index
    %c0_7 = arith.constant 0 : index
    %12 = vector.load %arg4[%c0_6, %c0_7] : memref<24x128xf32, #tpu.memory_space<vmem>>, vector<24x128xf32>
    tpu.vector_store %arg4[%c0_6, %c0_7], %11 {strides = array<i32>} : memref<24x128xf32, #tpu.memory_space<vmem>>, vector<24x128xf32>,
    return
  }
  func.func @transform_0(%arg0: i32) -> (i32, i32) {
    %c0_i32 = arith.constant 0 : i32
    %c0_i32_0 = arith.constant 0 : i32
    return %arg0, %c0_i32 : i32, i32
  }
  func.func @transform_1(%arg0: i32) -> (i32, i32) {
    %c0_i32 = arith.constant 0 : i32
    %c0_i32_0 = arith.constant 0 : i32
    %c0_i32_1 = arith.constant 0 : i32
    return %c0_i32, %c0_i32_0 : i32, i32
  }
  func.func @transform_2(%arg0: i32) -> (i32, i32) {
    %c0_i32 = arith.constant 0 : i32
    %c0_i32_0 = arith.constant 0 : i32
    %c0_i32_1 = arith.constant 0 : i32
    return %c0_i32, %c0_i32_0 : i32, i32
  }
  func.func @transform_3(%arg0: i32) -> (i32, i32) {
    %c0_i32 = arith.constant 0 : i32
    %c0_i32_0 = arith.constant 0 : i32
    return %arg0, %c0_i32 : i32, i32
  }
}

module attributes {stable_mosaic.version = 11 : i64} {
  func.func @_matmul_act_kernel(%arg0: i32, %arg1: memref<8x384xbf16, #tpu.memory_space<vmem>>, %arg2: memref<384x128xbf16, #tpu.memory_space<vmem>>, %arg3: memref<8x128xf32, #tpu.memory_space<vmem>>) attributes {dimension_semantics = [#tpu.dimension_semantics<parallel>], iteration_bounds = array<i64: 1>, scalar_prefetch = 0 : i64, scratch_operands = 0 : i64, tpu.core_type = #tpu.core_type<tc>, window_params = [{transform_indices = @transform_0, window_bounds = array<i64: 8, 384>}, {pipeline_mode = #tpu.pipeline_mode<synchronous>, transform_indices = @transform_1, window_bounds = array<i64: 384, 128>}, {transform_indices = @transform_2, window_bounds = array<i64: 8, 128>}]} {
    %c0 = arith.constant 0 : index
    %c0_0 = arith.constant 0 : index
    %0 = vector.load %arg1[%c0, %c0_0] : memref<8x384xbf16, #tpu.memory_space<vmem>>, vector<8x384xbf16>
    %c0_1 = arith.constant 0 : index
    %c0_2 = arith.constant 0 : index
    %1 = vector.load %arg2[%c0_1, %c0_2] : memref<384x128xbf16, #tpu.memory_space<vmem>>, vector<384x128xbf16>
    %cst = arith.constant dense<0.000000e+00> : vector<8x128xf32>
    %2 = tpu.matmul %0, %1, %cst {dimension_numbers = #tpu.dot_dimension_numbers<[1], [0], [0], [1], [0, 0, 1, 1], [], []>} : vector<8x384xbf16>, vector<384x128xbf16>, vector<8x128xf32> -> vector<8x128xf32>
    %c0_3 = arith.constant 0 : index
    %c0_4 = arith.constant 0 : index
    %3 = vector.load %arg3[%c0_3, %c0_4] : memref<8x128xf32, #tpu.memory_space<vmem>>, vector<8x128xf32>
    tpu.vector_store %arg3[%c0_3, %c0_4], %2 {strides = array<i32>} : memref<8x128xf32, #tpu.memory_space<vmem>>, vector<8x128xf32>,
    return
  }
  func.func @transform_0(%arg0: i32) -> (i32, i32) {
    %c0_i32 = arith.constant 0 : i32
    %c0_i32_0 = arith.constant 0 : i32
    return %arg0, %c0_i32 : i32, i32
  }
  func.func @transform_1(%arg0: i32) -> (i32, i32) {
    %c0_i32 = arith.constant 0 : i32
    %c0_i32_0 = arith.constant 0 : i32
    %c0_i32_1 = arith.constant 0 : i32
    return %c0_i32, %c0_i32_0 : i32, i32
  }
  func.func @transform_2(%arg0: i32) -> (i32, i32) {
    %c0_i32 = arith.constant 0 : i32
    %c0_i32_0 = arith.constant 0 : i32
    return %arg0, %c0_i32 : i32, i32
  }
}

</mosaic_0001>

<llo_original>
// kernel: encoder_forward.6
$region0: #{encoder_forward.6}
  #allocation0 [shape = 'u32[]', space=smem, size = 0x4, offset = 0x4, fixed_abs, tag = 'smem constant byte address 0x4 - core index']
  #allocation1 [shape = 'u32[144,128]{1,0:T(1,128)}', space=vmem, size = 0x12000, scoped, tag = 'internal scratch']
  %s0 = inlined_call_operand.vmem [shape: bf16[512,128], index: 0, kind: input, shape index: {}]
  %s1 = inlined_call_operand.vmem [shape: bf16[128,128], index: 1, kind: input, shape index: {}]
  %s2 = inlined_call_operand.vmem [shape: f32[512,128], index: 2, kind: output, shape index: {}]
  %s3 = sld [smem:[#allocation0]]
  $region18: #{encoder_forward.6} parent=0
    _
  %s5 = ssub.s32 1, %s3
  %s6 = scalar_select 0, %s5, %s3
  // Predicated region
  $region2: #{encoder_forward.6} parent=0 // pred_check
    _
  $region3: #{encoder_forward.6} parent=0 // pred_check_branch
    %8 = sbr.rel (0) target = $region5
  $region4: #{encoder_forward.6} parent=0 // pred_region
    _
  $region5: #{encoder_forward.6} parent=0 // pred_fallthru
    _
  // Predicated region
  $region6: #{encoder_forward.6} parent=0 // pred_check
    _
  $region7: #{encoder_forward.6} parent=0 // pred_check_branch
    %10 = sbr.rel (0) target = $region9
  $region8: #{encoder_forward.6} parent=0 // pred_region
    _
  $region9: #{encoder_forward.6} parent=0 // pred_fallthru
    _
  %v12 = vld [vmem:[%s0] sm:$0xf]
  %v13 = vld [vmem:[%s0 + $0x4] sm:$0xf]
  %v14 = vld [vmem:[%s0 + $0x8] sm:$0xf]
  %v15 = vld [vmem:[%s0 + $0xc] sm:$0xf]
  %v16 = vld [vmem:[%s0 + $0x10] sm:$0xf]
  %v17 = vld [vmem:[%s0 + $0x14] sm:$0xf]
  %v18 = vld [vmem:[%s0 + $0x18] sm:$0xf]
  %v19 = vld [vmem:[%s0 + $0x1c] sm:$0xf]
  %v20 = vld [vmem:[%s0 + $0x20] sm:$0xf]
  %v21 = vld [vmem:[%s0 + $0x24] sm:$0xf]
  %v22 = vld [vmem:[%s0 + $0x28] sm:$0xf]
  %v23 = vld [vmem:[%s0 + $0x2c] sm:$0xf]
  %v24 = vld [vmem:[%s0 + $0x30] sm:$0xf]
  %v25 = vld [vmem:[%s0 + $0x34] sm:$0xf]
  %v26 = vld [vmem:[%s0 + $0x38] sm:$0xf]
  %v27 = vld [vmem:[%s0 + $0x3c] sm:$0xf]
  %v28 = vld [vmem:[%s0 + $0x40] sm:$0xf]
  %v29 = vld [vmem:[%s0 + $0x44] sm:$0xf]
  %v30 = vld [vmem:[%s0 + $0x48] sm:$0xf]
  %v31 = vld [vmem:[%s0 + $0x4c] sm:$0xf]
  %v32 = vld [vmem:[%s0 + $0x50] sm:$0xf]
  %v33 = vld [vmem:[%s0 + $0x54] sm:$0xf]
  %v34 = vld [vmem:[%s0 + $0x58] sm:$0xf]
  %v35 = vld [vmem:[%s0 + $0x5c] sm:$0xf]
  %v36 = vld [vmem:[%s0 + $0x60] sm:$0xf]
  %v37 = vld [vmem:[%s0 + $0x64] sm:$0xf]
  %v38 = vld [vmem:[%s0 + $0x68] sm:$0xf]
  %v39 = vld [vmem:[%s0 + $0x6c] sm:$0xf]
  %v40 = vld [vmem:[%s0 + $0x70] sm:$0xf]
  %v41 = vld [vmem:[%s0 + $0x74] sm:$0xf]
  %v42 = vld [vmem:[%s0 + $0x78] sm:$0xf]
  %v43 = vld [vmem:[%s0 + $0x7c] sm:$0xf]
  %v44 = vld [vmem:[%s0 + $0x80] sm:$0xf]
  %v45 = vld [vmem:[%s0 + $0x84] sm:$0xf]
  %v46 = vld [vmem:[%s0 + $0x88] sm:$0xf]
  %v47 = vld [vmem:[%s0 + $0x8c] sm:$0xf]
  %v48 = vld [vmem:[%s0 + $0x90] sm:$0xf]
  %v49 = vld [vmem:[%s0 + $0x94] sm:$0xf]
  %v50 = vld [vmem:[%s0 + $0x98] sm:$0xf]
  %v51 = vld [vmem:[%s0 + $0x9c] sm:$0xf]
  %v52 = vld [vmem:[%s0 + $0xa0] sm:$0xf]
  %v53 = vld [vmem:[%s0 + $0xa4] sm:$0xf]
  %v54 = vld [vmem:[%s0 + $0xa8] sm:$0xf]
  %v55 = vld [vmem:[%s0 + $0xac] sm:$0xf]
  %v56 = vld [vmem:[%s0 + $0xb0] sm:$0xf]
  %v57 = vld [vmem:[%s0 + $0xb4] sm:$0xf]
  %v58 = vld [vmem:[%s0 + $0xb8] sm:$0xf]
  %v59 = vld [vmem:[%s0 + $0xbc] sm:$0xf]
  %v60 = vld [vmem:[%s0 + $0xc0] sm:$0xf]
  %v61 = vld [vmem:[%s0 + $0xc4] sm:$0xf]
  %v62 = vld [vmem:[%s0 + $0xc8] sm:$0xf]
  %v63 = vld [vmem:[%s0 + $0xcc] sm:$0xf]
  %v64 = vld [vmem:[%s0 + $0xd0] sm:$0xf]
  %v65 = vld [vmem:[%s0 + $0xd4] sm:$0xf]
  %v66 = vld [vmem:[%s0 + $0xd8] sm:$0xf]
  %v67 = vld [vmem:[%s0 + $0xdc] sm:$0xf]
  %v68 = vld [vmem:[%s0 + $0xe0] sm:$0xf]
  %v69 = vld [vmem:[%s0 + $0xe4] sm:$0xf]
  %v70 = vld [vmem:[%s0 + $0xe8] sm:$0xf]
  %v71 = vld [vmem:[%s0 + $0xec] sm:$0xf]
  %v72 = vld [vmem:[%s0 + $0xf0] sm:$0xf]
  %v73 = vld [vmem:[%s0 + $0xf4] sm:$0xf]
  %v74 = vld [vmem:[%s0 + $0xf8] sm:$0xf]
  %v75 = vld [vmem:[%s0 + $0xfc] sm:$0xf]
  %v76 = vld [vmem:[%s1] sm:$0xf]
  %v77 = vld [vmem:[%s1 + $0x4] sm:$0xf]
  %v78 = vld [vmem:[%s1 + $0x8] sm:$0xf]
  %v79 = vld [vmem:[%s1 + $0xc] sm:$0xf]
  %v80 = vld [vmem:[%s1 + $0x10] sm:$0xf]
  %v81 = vld [vmem:[%s1 + $0x14] sm:$0xf]
  %v82 = vld [vmem:[%s1 + $0x18] sm:$0xf]
  %v83 = vld [vmem:[%s1 + $0x1c] sm:$0xf]
  %v84 = vld [vmem:[%s1 + $0x20] sm:$0xf]
  %v85 = vld [vmem:[%s1 + $0x24] sm:$0xf]
  %v86 = vld [vmem:[%s1 + $0x28] sm:$0xf]
  %v87 = vld [vmem:[%s1 + $0x2c] sm:$0xf]
  %v88 = vld [vmem:[%s1 + $0x30] sm:$0xf]
  %v89 = vld [vmem:[%s1 + $0x34] sm:$0xf]
  %v90 = vld [vmem:[%s1 + $0x38] sm:$0xf]
  %v91 = vld [vmem:[%s1 + $0x3c] sm:$0xf]
  %v156 = vunpack.c.l.b16 %v12
  %v157 = vunpack.c.l.b16 %v13
  %v158 = vunpack.c.l.b16 %v14
  %v159 = vunpack.c.l.b16 %v15
  %v160 = vunpack.c.l.b16 %v16
  %v161 = vunpack.c.l.b16 %v17
  %v162 = vunpack.c.l.b16 %v18
  %v163 = vunpack.c.l.b16 %v19
  %v164 = vunpack.c.l.b16 %v20
  %v165 = vunpack.c.l.b16 %v21
  %v166 = vunpack.c.l.b16 %v22
  %v167 = vunpack.c.l.b16 %v23
  %v168 = vunpack.c.l.b16 %v24
  %v169 = vunpack.c.l.b16 %v25
  %v170 = vunpack.c.l.b16 %v26
  %v171 = vunpack.c.l.b16 %v27
  %v172 = vunpack.c.l.b16 %v28
  %v173 = vunpack.c.l.b16 %v29
  %v174 = vunpack.c.l.b16 %v30
  %v175 = vunpack.c.l.b16 %v31
  %v176 = vunpack.c.l.b16 %v32
  %v177 = vunpack.c.l.b16 %v33
  %v178 = vunpack.c.l.b16 %v34
  %v179 = vunpack.c.l.b16 %v35
  %v180 = vunpack.c.l.b16 %v36
  %v181 = vunpack.c.l.b16 %v37
  %v182 = vunpack.c.l.b16 %v38
  %v183 = vunpack.c.l.b16 %v39
  %v184 = vunpack.c.l.b16 %v40
  %v185 = vunpack.c.l.b16 %v41
  %v186 = vunpack.c.l.b16 %v42
  %v187 = vunpack.c.l.b16 %v43
  %v188 = vunpack.c.l.b16 %v44
  %v189 = vunpack.c.l.b16 %v45
  %v190 = vunpack.c.l.b16 %v46
  %v191 = vunpack.c.l.b16 %v47
  %v192 = vunpack.c.l.b16 %v48
  %v193 = vunpack.c.l.b16 %v49
  %v194 = vunpack.c.l.b16 %v50
  %v195 = vunpack.c.l.b16 %v51
  %v196 = vunpack.c.l.b16 %v52
  %v197 = vunpack.c.l.b16 %v53
  %v198 = vunpack.c.l.b16 %v54
  %v199 = vunpack.c.l.b16 %v55
  %v200 = vunpack.c.l.b16 %v56
  %v201 = vunpack.c.l.b16 %v57
  %v202 = vunpack.c.l.b16 %v58
  %v203 = vunpack.c.l.b16 %v59
  %v204 = vunpack.c.l.b16 %v60
  %v205 = vunpack.c.l.b16 %v61
  %v206 = vunpack.c.l.b16 %v62
  %v207 = vunpack.c.l.b16 %v63
  %v208 = vunpack.c.l.b16 %v64
  %v209 = vunpack.c.l.b16 %v65
  %v210 = vunpack.c.l.b16 %v66
  %v211 = vunpack.c.l.b16 %v67
  %v212 = vunpack.c.l.b16 %v68
  %v213 = vunpack.c.l.b16 %v69
  %v214 = vunpack.c.l.b16 %v70
  %v215 = vunpack.c.l.b16 %v71
  %v216 = vunpack.c.l.b16 %v72
  %v217 = vunpack.c.l.b16 %v73
  %v218 = vunpack.c.l.b16 %v74
  %v219 = vunpack.c.l.b16 %v75
  %v220 = vpack.c.b16 %v157, %v156
  %v221 = vpack.c.b16 %v159, %v158
  %v222 = vpack.c.b16 %v161, %v160
  %v223 = vpack.c.b16 %v163, %v162
  %v224 = vpack.c.b16 %v165, %v164
  %v225 = vpack.c.b16 %v167, %v166
  %v226 = vpack.c.b16 %v169, %v168
  %v227 = vpack.c.b16 %v171, %v170
  %v228 = vpack.c.b16 %v173, %v172
  %v229 = vpack.c.b16 %v175, %v174
  %v230 = vpack.c.b16 %v177, %v176
  %v231 = vpack.c.b16 %v179, %v178
  %v232 = vpack.c.b16 %v181, %v180
  %v233 = vpack.c.b16 %v183, %v182
  %v234 = vpack.c.b16 %v185, %v184
  %v235 = vpack.c.b16 %v187, %v186
  %v236 = vpack.c.b16 %v189, %v188
  %v237 = vpack.c.b16 %v191, %v190
  %v238 = vpack.c.b16 %v193, %v192
  %v239 = vpack.c.b16 %v195, %v194
  %v240 = vpack.c.b16 %v197, %v196
  %v241 = vpack.c.b16 %v199, %v198
  %v242 = vpack.c.b16 %v201, %v200
  %v243 = vpack.c.b16 %v203, %v202
  %v244 = vpack.c.b16 %v205, %v204
  %v245 = vpack.c.b16 %v207, %v206
  %v246 = vpack.c.b16 %v209, %v208
  %v247 = vpack.c.b16 %v211, %v210
  %v248 = vpack.c.b16 %v213, %v212
  %v249 = vpack.c.b16 %v215, %v214
  %v250 = vpack.c.b16 %v217, %v216
  %v251 = vpack.c.b16 %v219, %v218
  %v300 = vunpack.c.l.b16 %v76
  %v301 = vunpack.c.l.b16 %v77
  %v302 = vunpack.c.l.b16 %v78
  %v303 = vunpack.c.l.b16 %v79
  %v304 = vunpack.c.l.b16 %v80
  %v305 = vunpack.c.l.b16 %v81
  %v306 = vunpack.c.l.b16 %v82
  %v307 = vunpack.c.l.b16 %v83
  %v308 = vunpack.c.l.b16 %v84
  %v309 = vunpack.c.l.b16 %v85
  %v310 = vunpack.c.l.b16 %v86
  %v311 = vunpack.c.l.b16 %v87
  %v312 = vunpack.c.l.b16 %v88
  %v313 = vunpack.c.l.b16 %v89
  %v314 = vunpack.c.l.b16 %v90
  %v315 = vunpack.c.l.b16 %v91
  %v316 = vpack.c.b16 %v301, %v300
  %v317 = vpack.c.b16 %v303, %v302
  %v318 = vpack.c.b16 %v305, %v304
  %v319 = vpack.c.b16 %v307, %v306
  %v320 = vpack.c.b16 %v309, %v308
  %v321 = vpack.c.b16 %v311, %v310
  %v322 = vpack.c.b16 %v313, %v312
  %v323 = vpack.c.b16 %v315, %v314
  %332 = vmatprep.subr.bf16.mxu0 0
  %333 = vmatpush1.bf16.msra.mxu0 %v316
  %334 = vmatprep.subr.bf16.mxu0 0
  %335 = vmatpush1.bf16.msra.mxu0 %v317
  %336 = vmatprep.subr.bf16.mxu0 0
  %337 = vmatpush1.bf16.msra.mxu0 %v318
  %338 = vmatprep.subr.bf16.mxu0 0
  %339 = vmatpush1.bf16.msra.mxu0 %v319
  %340 = vmatprep.subr.bf16.mxu0 0
  %341 = vmatpush1.bf16.msra.mxu0 %v320
  %342 = vmatprep.subr.bf16.mxu0 0
  %343 = vmatpush1.bf16.msra.mxu0 %v321
  %344 = vmatprep.subr.bf16.mxu0 0
  %345 = vmatpush1.bf16.msra.mxu0 %v322
  %346 = vmatprep.subr.bf16.mxu0 0
  %347 = vmatpush1.bf16.msra.mxu0 %v323
  %348 = vmatprep.subr.bf16.mxu0 0
  %349 = vmatpush1.bf16.msra.mxu0 0
  %350 = vmatprep.subr.bf16.mxu0 0
  %351 = vmatpush1.bf16.msra.mxu0 0
  %352 = vmatprep.subr.bf16.mxu0 0
  %353 = vmatpush1.bf16.msra.mxu0 0
  %354 = vmatprep.subr.bf16.mxu0 0
  %355 = vmatpush1.bf16.msra.mxu0 0
  %356 = vmatprep.subr.bf16.mxu0 0
  %357 = vmatpush1.bf16.msra.mxu0 0
  %358 = vmatprep.subr.bf16.mxu0 0
  %359 = vmatpush1.bf16.msra.mxu0 0
  %360 = vmatprep.subr.bf16.mxu0 0
  %361 = vmatpush1.bf16.msra.mxu0 0
  %362 = vmatprep.subr.bf16.mxu0 0
  %363 = vmatpush1.bf16.msra.mxu0 0
  %364 = vmatprep.mubr.bf16.mxu0 0
  %365 = vmatmul.mubr.bf16.gmra.mrb[0].mxu0 %v220
  %v366 = vpop.f32.mrb[0].mxu0
  %v367 = vadd.f32 0.0, %v366
  %v368 = vpop.f32.mrb[0].mxu0
  %v369 = vpop.f32.mrb[0].mxu0
  %v370 = vadd.f32 0.0, %v369
  %v371 = vpop.f32.mrb[0].mxu0
  %372 = vmatprep.mubr.bf16.mxu0 0
  %373 = vmatmul.mubr.bf16.gmra.mrb[0].mxu0 %v221
  %v374 = vpop.f32.mrb[0].mxu0
  %v375 = vadd.f32 0.0, %v374
  %v376 = vpop.f32.mrb[0].mxu0
  %v377 = vpop.f32.mrb[0].mxu0
  %v378 = vadd.f32 0.0, %v377
  %v379 = vpop.f32.mrb[0].mxu0
  %380 = vmatprep.mubr.bf16.mxu0 0
  %381 = vmatmul.mubr.bf16.gmra.mrb[0].mxu0 %v222
  %v382 = vpop.f32.mrb[0].mxu0
  %v383 = vadd.f32 0.0, %v382
  %v384 = vpop.f32.mrb[0].mxu0
  %v385 = vpop.f32.mrb[0].mxu0
  %v386 = vadd.f32 0.0, %v385
  %v387 = vpop.f32.mrb[0].mxu0
  %388 = vmatprep.mubr.bf16.mxu0 0
  %389 = vmatmul.mubr.bf16.gmra.mrb[0].mxu0 %v223
  %v390 = vpop.f32.mrb[0].mxu0
  %v391 = vadd.f32 0.0, %v390
  %v392 = vpop.f32.mrb[0].mxu0
  %v393 = vpop.f32.mrb[0].mxu0
  %v394 = vadd.f32 0.0, %v393
  %v395 = vpop.f32.mrb[0].mxu0
  %396 = vmatprep.mubr.bf16.mxu0 0
  %397 = vmatmul.mubr.bf16.gmra.mrb[0].mxu0 %v224
  %v398 = vpop.f32.mrb[0].mxu0
  %v399 = vadd.f32 0.0, %v398
  %v400 = vpop.f32.mrb[0].mxu0
  %v401 = vpop.f32.mrb[0].mxu0
  %v402 = vadd.f32 0.0, %v401
  %v403 = vpop.f32.mrb[0].mxu0
  %404 = vmatprep.mubr.bf16.mxu0 0
  %405 = vmatmul.mubr.bf16.gmra.mrb[0].mxu0 %v225
  %v406 = vpop.f32.mrb[0].mxu0
  %v407 = vadd.f32 0.0, %v406
  %v408 = vpop.f32.mrb[0].mxu0
  %v409 = vpop.f32.mrb[0].mxu0
  %v410 = vadd.f32 0.0, %v409
  %v411 = vpop.f32.mrb[0].mxu0
  %412 = vmatprep.mubr.bf16.mxu0 0
  %413 = vmatmul.mubr.bf16.gmra.mrb[0].mxu0 %v226
  %v414 = vpop.f32.mrb[0].mxu0
  %v415 = vadd.f32 0.0, %v414
  %v416 = vpop.f32.mrb[0].mxu0
  %v417 = vpop.f32.mrb[0].mxu0
  %v418 = vadd.f32 0.0, %v417
  %v419 = vpop.f32.mrb[0].mxu0
  %420 = vmatprep.mubr.bf16.mxu0 0
  %421 = vmatmul.mubr.bf16.gmra.mrb[0].mxu0 %v227
  %v422 = vpop.f32.mrb[0].mxu0
  %v423 = vadd.f32 0.0, %v422
  %v424 = vpop.f32.mrb[0].mxu0
  %v425 = vpop.f32.mrb[0].mxu0
  %v426 = vadd.f32 0.0, %v425
  %v427 = vpop.f32.mrb[0].mxu0
  %428 = vmatprep.mubr.bf16.mxu0 0
  %429 = vmatmul.mubr.bf16.gmra.mrb[0].mxu0 %v228
  %v430 = vpop.f32.mrb[0].mxu0
  %v431 = vadd.f32 0.0, %v430
  %v432 = vpop.f32.mrb[0].mxu0
  %v433 = vpop.f32.mrb[0].mxu0
  %v434 = vadd.f32 0.0, %v433
  %v435 = vpop.f32.mrb[0].mxu0
  %436 = vmatprep.mubr.bf16.mxu0 0
  %437 = vmatmul.mubr.bf16.gmra.mrb[0].mxu0 %v229
  %v438 = vpop.f32.mrb[0].mxu0
  %v439 = vadd.f32 0.0, %v438
  %v440 = vpop.f32.mrb[0].mxu0
  %v441 = vpop.f32.mrb[0].mxu0
  %v442 = vadd.f32 0.0, %v441
  %v443 = vpop.f32.mrb[0].mxu0
  %444 = vmatprep.mubr.bf16.mxu0 0
  %445 = vmatmul.mubr.bf16.gmra.mrb[0].mxu0 %v230
  %v446 = vpop.f32.mrb[0].mxu0
  %v447 = vadd.f32 0.0, %v446
  %v448 = vpop.f32.mrb[0].mxu0
  %v449 = vpop.f32.mrb[0].mxu0
  %v450 = vadd.f32 0.0, %v449
  %v451 = vpop.f32.mrb[0].mxu0
  %452 = vmatprep.mubr.bf16.mxu0 0
  %453 = vmatmul.mubr.bf16.gmra.mrb[0].mxu0 %v231
  %v454 = vpop.f32.mrb[0].mxu0
  %v455 = vadd.f32 0.0, %v454
  %v456 = vpop.f32.mrb[0].mxu0
  %v457 = vpop.f32.mrb[0].mxu0
  %v458 = vadd.f32 0.0, %v457
  %v459 = vpop.f32.mrb[0].mxu0
  %460 = vmatprep.mubr.bf16.mxu0 0
  %461 = vmatmul.mubr.bf16.gmra.mrb[0].mxu0 %v232
  %v462 = vpop.f32.mrb[0].mxu0
  %v463 = vadd.f32 0.0, %v462
  %v464 = vpop.f32.mrb[0].mxu0
  %v465 = vpop.f32.mrb[0].mxu0
  %v466 = vadd.f32 0.0, %v465
  %v467 = vpop.f32.mrb[0].mxu0
  %468 = vmatprep.mubr.bf16.mxu0 0
  %469 = vmatmul.mubr.bf16.gmra.mrb[0].mxu0 %v233
  %v470 = vpop.f32.mrb[0].mxu0
  %v471 = vadd.f32 0.0, %v470
  %v472 = vpop.f32.mrb[0].mxu0
  %v473 = vpop.f32.mrb[0].mxu0
  %v474 = vadd.f32 0.0, %v473
  %v475 = vpop.f32.mrb[0].mxu0
  %476 = vmatprep.mubr.bf16.mxu0 0
  %477 = vmatmul.mubr.bf16.gmra.mrb[0].mxu0 %v234
  %v478 = vpop.f32.mrb[0].mxu0
  %v479 = vadd.f32 0.0, %v478
  %v480 = vpop.f32.mrb[0].mxu0
  %v481 = vpop.f32.mrb[0].mxu0
  %v482 = vadd.f32 0.0, %v481
  %v483 = vpop.f32.mrb[0].mxu0
  %484 = vmatprep.mubr.bf16.mxu0 0
  %485 = vmatmul.mubr.bf16.gmra.mrb[0].mxu0 %v235
  %v486 = vpop.f32.mrb[0].mxu0
  %v487 = vadd.f32 0.0, %v486
  %v488 = vpop.f32.mrb[0].mxu0
  %v489 = vpop.f32.mrb[0].mxu0
  %v490 = vadd.f32 0.0, %v489
  %v491 = vpop.f32.mrb[0].mxu0
  %492 = vmatprep.mubr.bf16.mxu0 0
  %493 = vmatmul.mubr.bf16.gmra.mrb[0].mxu0 %v236
  %v494 = vpop.f32.mrb[0].mxu0
  %v495 = vadd.f32 0.0, %v494
  %v496 = vpop.f32.mrb[0].mxu0
  %v497 = vpop.f32.mrb[0].mxu0
  %v498 = vadd.f32 0.0, %v497
  %v499 = vpop.f32.mrb[0].mxu0
  %500 = vmatprep.mubr.bf16.mxu0 0
  %501 = vmatmul.mubr.bf16.gmra.mrb[0].mxu0 %v237
  %v502 = vpop.f32.mrb[0].mxu0
  %v503 = vadd.f32 0.0, %v502
  %v504 = vpop.f32.mrb[0].mxu0
  %v505 = vpop.f32.mrb[0].mxu0
  %v506 = vadd.f32 0.0, %v505
  %v507 = vpop.f32.mrb[0].mxu0
  %508 = vmatprep.mubr.bf16.mxu0 0
  %509 = vmatmul.mubr.bf16.gmra.mrb[0].mxu0 %v238
  %v510 = vpop.f32.mrb[0].mxu0
  %v511 = vadd.f32 0.0, %v510
  %v512 = vpop.f32.mrb[0].mxu0
  %v513 = vpop.f32.mrb[0].mxu0
  %v514 = vadd.f32 0.0, %v513
  %v515 = vpop.f32.mrb[0].mxu0
  %516 = vmatprep.mubr.bf16.mxu0 0
  %517 = vmatmul.mubr.bf16.gmra.mrb[0].mxu0 %v239
  %v518 = vpop.f32.mrb[0].mxu0
  %v519 = vadd.f32 0.0, %v518
  %v520 = vpop.f32.mrb[0].mxu0
  %v521 = vpop.f32.mrb[0].mxu0
  %v522 = vadd.f32 0.0, %v521
  %v523 = vpop.f32.mrb[0].mxu0
  %524 = vmatprep.mubr.bf16.mxu0 0
  %525 = vmatmul.mubr.bf16.gmra.mrb[0].mxu0 %v240
  %v526 = vpop.f32.mrb[0].mxu0
  %v527 = vadd.f32 0.0, %v526
  %v528 = vpop.f32.mrb[0].mxu0
  %v529 = vpop.f32.mrb[0].mxu0
  %v530 = vadd.f32 0.0, %v529
  %v531 = vpop.f32.mrb[0].mxu0
  %532 = vmatprep.mubr.bf16.mxu0 0
  %533 = vmatmul.mubr.bf16.gmra.mrb[0].mxu0 %v241
  %v534 = vpop.f32.mrb[0].mxu0
  %v535 = vadd.f32 0.0, %v534
  %v536 = vpop.f32.mrb[0].mxu0
  %v537 = vpop.f32.mrb[0].mxu0
  %v538 = vadd.f32 0.0, %v537
  %v539 = vpop.f32.mrb[0].mxu0
  %540 = vmatprep.mubr.bf16.mxu0 0
  %541 = vmatmul.mubr.bf16.gmra.mrb[0].mxu0 %v242
  %v542 = vpop.f32.mrb[0].mxu0
  %v543 = vadd.f32 0.0, %v542
  %v544 = vpop.f32.mrb[0].mxu0
  %v545 = vpop.f32.mrb[0].mxu0
  %v546 = vadd.f32 0.0, %v545
  %v547 = vpop.f32.mrb[0].mxu0
  %548 = vmatprep.mubr.bf16.mxu0 0
  %549 = vmatmul.mubr.bf16.gmra.mrb[0].mxu0 %v243
  %v550 = vpop.f32.mrb[0].mxu0
  %v551 = vadd.f32 0.0, %v550
  %v552 = vpop.f32.mrb[0].mxu0
  %v553 = vpop.f32.mrb[0].mxu0
  %v554 = vadd.f32 0.0, %v553
  %v555 = vpop.f32.mrb[0].mxu0
  %556 = vmatprep.mubr.bf16.mxu0 0
  %557 = vmatmul.mubr.bf16.gmra.mrb[0].mxu0 %v244
  %v558 = vpop.f32.mrb[0].mxu0
  %v559 = vadd.f32 0.0, %v558
  %v560 = vpop.f32.mrb[0].mxu0
  %v561 = vpop.f32.mrb[0].mxu0
  %v562 = vadd.f32 0.0, %v561
  %v563 = vpop.f32.mrb[0].mxu0
  %564 = vmatprep.mubr.bf16.mxu0 0
  %565 = vmatmul.mubr.bf16.gmra.mrb[0].mxu0 %v245
  %v566 = vpop.f32.mrb[0].mxu0
  %v567 = vadd.f32 0.0, %v566
  %v568 = vpop.f32.mrb[0].mxu0
  %v569 = vpop.f32.mrb[0].mxu0
  %v570 = vadd.f32 0.0, %v569
  %v571 = vpop.f32.mrb[0].mxu0
  %572 = vmatprep.mubr.bf16.mxu0 0
  %573 = vmatmul.mubr.bf16.gmra.mrb[0].mxu0 %v246
  %v574 = vpop.f32.mrb[0].mxu0
  %v575 = vadd.f32 0.0, %v574
  %v576 = vpop.f32.mrb[0].mxu0
  %v577 = vpop.f32.mrb[0].mxu0
  %v578 = vadd.f32 0.0, %v577
  %v579 = vpop.f32.mrb[0].mxu0
  %580 = vmatprep.mubr.bf16.mxu0 0
  %581 = vmatmul.mubr.bf16.gmra.mrb[0].mxu0 %v247
  %v582 = vpop.f32.mrb[0].mxu0
  %v583 = vadd.f32 0.0, %v582
  %v584 = vpop.f32.mrb[0].mxu0
  %v585 = vpop.f32.mrb[0].mxu0
  %v586 = vadd.f32 0.0, %v585
  %v587 = vpop.f32.mrb[0].mxu0
  %588 = vmatprep.mubr.bf16.mxu0 0
  %589 = vmatmul.mubr.bf16.gmra.mrb[0].mxu0 %v248
  %v590 = vpop.f32.mrb[0].mxu0
  %v591 = vadd.f32 0.0, %v590
  %v592 = vpop.f32.mrb[0].mxu0
  %v593 = vpop.f32.mrb[0].mxu0
  %v594 = vadd.f32 0.0, %v593
  %v595 = vpop.f32.mrb[0].mxu0
  %596 = vmatprep.mubr.bf16.mxu0 0
  %597 = vmatmul.mubr.bf16.gmra.mrb[0].mxu0 %v249
  %v598 = vpop.f32.mrb[0].mxu0
  %v599 = vadd.f32 0.0, %v598
  %v600 = vpop.f32.mrb[0].mxu0
  %v601 = vpop.f32.mrb[0].mxu0
  %v602 = vadd.f32 0.0, %v601
  %v603 = vpop.f32.mrb[0].mxu0
  %604 = vmatprep.mubr.bf16.mxu0 0
  %605 = vmatmul.mubr.bf16.gmra.mrb[0].mxu0 %v250
  %v606 = vpop.f32.mrb[0].mxu0
  %v607 = vadd.f32 0.0, %v606
  %v608 = vpop.f32.mrb[0].mxu0
  %v609 = vpop.f32.mrb[0].mxu0
  %v610 = vadd.f32 0.0, %v609
  %v611 = vpop.f32.mrb[0].mxu0
  %612 = vmatprep.mubr.bf16.mxu0 0
  %613 = vmatmul.mubr.bf16.gmra.mrb[0].mxu0 %v251
  %v614 = vpop.f32.mrb[0].mxu0
  %v615 = vadd.f32 0.0, %v614
  %v616 = vpop.f32.mrb[0].mxu0
  %v617 = vpop.f32.mrb[0].mxu0
  %v618 = vadd.f32 0.0, %v617
  %v619 = vpop.f32.mrb[0].mxu0
  %620 = vdwg.mxu0
  %vm621 = vcmp.ge.f32.partialorder %v367, 0.0
  %vm622 = vcmp.ge.f32.partialorder %v370, 0.0
  %vm623 = vcmp.ge.f32.partialorder %v375, 0.0
  %vm624 = vcmp.ge.f32.partialorder %v378, 0.0
  %vm625 = vcmp.ge.f32.partialorder %v383, 0.0
  %vm626 = vcmp.ge.f32.partialorder %v386, 0.0
  %vm627 = vcmp.ge.f32.partialorder %v391, 0.0
  %vm628 = vcmp.ge.f32.partialorder %v394, 0.0
  %vm629 = vcmp.ge.f32.partialorder %v399, 0.0
  %vm630 = vcmp.ge.f32.partialorder %v402, 0.0
  %vm631 = vcmp.ge.f32.partialorder %v407, 0.0
  %vm632 = vcmp.ge.f32.partialorder %v410, 0.0
  %vm633 = vcmp.ge.f32.partialorder %v415, 0.0
  %vm634 = vcmp.ge.f32.partialorder %v418, 0.0
  %vm635 = vcmp.ge.f32.partialorder %v423, 0.0
  %vm636 = vcmp.ge.f32.partialorder %v426, 0.0
  %vm637 = vcmp.ge.f32.partialorder %v431, 0.0
  %vm638 = vcmp.ge.f32.partialorder %v434, 0.0
  %vm639 = vcmp.ge.f32.partialorder %v439, 0.0
  %vm640 = vcmp.ge.f32.partialorder %v442, 0.0
  %vm641 = vcmp.ge.f32.partialorder %v447, 0.0
  %vm642 = vcmp.ge.f32.partialorder %v450, 0.0
  %vm643 = vcmp.ge.f32.partialorder %v455, 0.0
  %vm644 = vcmp.ge.f32.partialorder %v458, 0.0
  %vm645 = vcmp.ge.f32.partialorder %v463, 0.0
  %vm646 = vcmp.ge.f32.partialorder %v466, 0.0
  %vm647 = vcmp.ge.f32.partialorder %v471, 0.0
  %vm648 = vcmp.ge.f32.partialorder %v474, 0.0
  %vm649 = vcmp.ge.f32.partialorder %v479, 0.0
  %vm650 = vcmp.ge.f32.partialorder %v482, 0.0
  %vm651 = vcmp.ge.f32.partialorder %v487, 0.0
  %vm652 = vcmp.ge.f32.partialorder %v490, 0.0
  %vm653 = vcmp.ge.f32.partialorder %v495, 0.0
  %vm654 = vcmp.ge.f32.partialorder %v498, 0.0
  %vm655 = vcmp.ge.f32.partialorder %v503, 0.0
  %vm656 = vcmp.ge.f32.partialorder %v506, 0.0
  %vm657 = vcmp.ge.f32.partialorder %v511, 0.0
  %vm658 = vcmp.ge.f32.partialorder %v514, 0.0
  %vm659 = vcmp.ge.f32.partialorder %v519, 0.0
  %vm660 = vcmp.ge.f32.partialorder %v522, 0.0
  %vm661 = vcmp.ge.f32.partialorder %v527, 0.0
  %vm662 = vcmp.ge.f32.partialorder %v530, 0.0
  %vm663 = vcmp.ge.f32.partialorder %v535, 0.0
  %vm664 = vcmp.ge.f32.partialorder %v538, 0.0
  %vm665 = vcmp.ge.f32.partialorder %v543, 0.0
  %vm666 = vcmp.ge.f32.partialorder %v546, 0.0
  %vm667 = vcmp.ge.f32.partialorder %v551, 0.0
  %vm668 = vcmp.ge.f32.partialorder %v554, 0.0
  %vm669 = vcmp.ge.f32.partialorder %v559, 0.0
  %vm670 = vcmp.ge.f32.partialorder %v562, 0.0
  %vm671 = vcmp.ge.f32.partialorder %v567, 0.0
  %vm672 = vcmp.ge.f32.partialorder %v570, 0.0
  %vm673 = vcmp.ge.f32.partialorder %v575, 0.0
  %vm674 = vcmp.ge.f32.partialorder %v578, 0.0
  %vm675 = vcmp.ge.f32.partialorder %v583, 0.0
  %vm676 = vcmp.ge.f32.partialorder %v586, 0.0
  %vm677 = vcmp.ge.f32.partialorder %v591, 0.0
  %vm678 = vcmp.ge.f32.partialorder %v594, 0.0
  %vm679 = vcmp.ge.f32.partialorder %v599, 0.0
  %vm680 = vcmp.ge.f32.partialorder %v602, 0.0
  %vm681 = vcmp.ge.f32.partialorder %v607, 0.0
  %vm682 = vcmp.ge.f32.partialorder %v610, 0.0
  %vm683 = vcmp.ge.f32.partialorder %v615, 0.0
  %vm684 = vcmp.ge.f32.partialorder %v618, 0.0
  %v685 = vmul.f32 %v367, 0.2
  %v686 = vmul.f32 %v370, 0.2
  %v687 = vmul.f32 %v375, 0.2
  %v688 = vmul.f32 %v378, 0.2
  %v689 = vmul.f32 %v383, 0.2
  %v690 = vmul.f32 %v386, 0.2
  %v691 = vmul.f32 %v391, 0.2
  %v692 = vmul.f32 %v394, 0.2
  %v693 = vmul.f32 %v399, 0.2
  %v694 = vmul.f32 %v402, 0.2
  %v695 = vmul.f32 %v407, 0.2
  %v696 = vmul.f32 %v410, 0.2
  %v697 = vmul.f32 %v415, 0.2
  %v698 = vmul.f32 %v418, 0.2
  %v699 = vmul.f32 %v423, 0.2
  %v700 = vmul.f32 %v426, 0.2
  %v701 = vmul.f32 %v431, 0.2
  %v702 = vmul.f32 %v434, 0.2
  %v703 = vmul.f32 %v439, 0.2
  %v704 = vmul.f32 %v442, 0.2
  %v705 = vmul.f32 %v447, 0.2
  %v706 = vmul.f32 %v450, 0.2
  %v707 = vmul.f32 %v455, 0.2
  %v708 = vmul.f32 %v458, 0.2
  %v709 = vmul.f32 %v463, 0.2
  %v710 = vmul.f32 %v466, 0.2
  %v711 = vmul.f32 %v471, 0.2
  %v712 = vmul.f32 %v474, 0.2
  %v713 = vmul.f32 %v479, 0.2
  %v714 = vmul.f32 %v482, 0.2
  %v715 = vmul.f32 %v487, 0.2
  %v716 = vmul.f32 %v490, 0.2
  %v717 = vmul.f32 %v495, 0.2
  %v718 = vmul.f32 %v498, 0.2
  %v719 = vmul.f32 %v503, 0.2
  %v720 = vmul.f32 %v506, 0.2
  %v721 = vmul.f32 %v511, 0.2
  %v722 = vmul.f32 %v514, 0.2
  %v723 = vmul.f32 %v519, 0.2
  %v724 = vmul.f32 %v522, 0.2
  %v725 = vmul.f32 %v527, 0.2
  %v726 = vmul.f32 %v530, 0.2
  %v727 = vmul.f32 %v535, 0.2
  %v728 = vmul.f32 %v538, 0.2
  %v729 = vmul.f32 %v543, 0.2
  %v730 = vmul.f32 %v546, 0.2
  %v731 = vmul.f32 %v551, 0.2
  %v732 = vmul.f32 %v554, 0.2
  %v733 = vmul.f32 %v559, 0.2
  %v734 = vmul.f32 %v562, 0.2
  %v735 = vmul.f32 %v567, 0.2
  %v736 = vmul.f32 %v570, 0.2
  %v737 = vmul.f32 %v575, 0.2
  %v738 = vmul.f32 %v578, 0.2
  %v739 = vmul.f32 %v583, 0.2
  %v740 = vmul.f32 %v586, 0.2
  %v741 = vmul.f32 %v591, 0.2
  %v742 = vmul.f32 %v594, 0.2
  %v743 = vmul.f32 %v599, 0.2
  %v744 = vmul.f32 %v602, 0.2
  %v745 = vmul.f32 %v607, 0.2
  %v746 = vmul.f32 %v610, 0.2
  %v747 = vmul.f32 %v615, 0.2
  %v748 = vmul.f32 %v618, 0.2
  %v749 = vsel %vm621, %v367, %v685
  %v750 = vsel %vm622, %v370, %v686
  %v751 = vsel %vm623, %v375, %v687
  %v752 = vsel %vm624, %v378, %v688
  %v753 = vsel %vm625, %v383, %v689
  %v754 = vsel %vm626, %v386, %v690
  %v755 = vsel %vm627, %v391, %v691
  %v756 = vsel %vm628, %v394, %v692
  %v757 = vsel %vm629, %v399, %v693
  %v758 = vsel %vm630, %v402, %v694
  %v759 = vsel %vm631, %v407, %v695
  %v760 = vsel %vm632, %v410, %v696
  %v761 = vsel %vm633, %v415, %v697
  %v762 = vsel %vm634, %v418, %v698
  %v763 = vsel %vm635, %v423, %v699
  %v764 = vsel %vm636, %v426, %v700
  %v765 = vsel %vm637, %v431, %v701
  %v766 = vsel %vm638, %v434, %v702
  %v767 = vsel %vm639, %v439, %v703
  %v768 = vsel %vm640, %v442, %v704
  %v769 = vsel %vm641, %v447, %v705
  %v770 = vsel %vm642, %v450, %v706
  %v771 = vsel %vm643, %v455, %v707
  %v772 = vsel %vm644, %v458, %v708
  %v773 = vsel %vm645, %v463, %v709
  %v774 = vsel %vm646, %v466, %v710
  %v775 = vsel %vm647, %v471, %v711
  %v776 = vsel %vm648, %v474, %v712
  %v777 = vsel %vm649, %v479, %v713
  %v778 = vsel %vm650, %v482, %v714
  %v779 = vsel %vm651, %v487, %v715
  %v780 = vsel %vm652, %v490, %v716
  %v781 = vsel %vm653, %v495, %v717
  %v782 = vsel %vm654, %v498, %v718
  %v783 = vsel %vm655, %v503, %v719
  %v784 = vsel %vm656, %v506, %v720
  %v785 = vsel %vm657, %v511, %v721
  %v786 = vsel %vm658, %v514, %v722
  %v787 = vsel %vm659, %v519, %v723
  %v788 = vsel %vm660, %v522, %v724
  %v789 = vsel %vm661, %v527, %v725
  %v790 = vsel %vm662, %v530, %v726
  %v791 = vsel %vm663, %v535, %v727
  %v792 = vsel %vm664, %v538, %v728
  %v793 = vsel %vm665, %v543, %v729
  %v794 = vsel %vm666, %v546, %v730
  %v795 = vsel %vm667, %v551, %v731
  %v796 = vsel %vm668, %v554, %v732
  %v797 = vsel %vm669, %v559, %v733
  %v798 = vsel %vm670, %v562, %v734
  %v799 = vsel %vm671, %v567, %v735
  %v800 = vsel %vm672, %v570, %v736
  %v801 = vsel %vm673, %v575, %v737
  %v802 = vsel %vm674, %v578, %v738
  %v803 = vsel %vm675, %v583, %v739
  %v804 = vsel %vm676, %v586, %v740
  %v805 = vsel %vm677, %v591, %v741
  %v806 = vsel %vm678, %v594, %v742
  %v807 = vsel %vm679, %v599, %v743
  %v808 = vsel %vm680, %v602, %v744
  %v809 = vsel %vm681, %v607, %v745
  %v810 = vsel %vm682, %v610, %v746
  %v811 = vsel %vm683, %v615, %v747
  %v812 = vsel %vm684, %v618, %v748
  %813 = vst [vmem:[%s2] sm:$0xff] %v749
  %814 = vst [vmem:[%s2 + $0x8] sm:$0xff] %v750
  %815 = vst [vmem:[%s2 + $0x10] sm:$0xff] %v751
  %816 = vst [vmem:[%s2 + $0x18] sm:$0xff] %v752
  %817 = vst [vmem:[%s2 + $0x20] sm:$0xff] %v753
  %818 = vst [vmem:[%s2 + $0x28] sm:$0xff] %v754
  %819 = vst [vmem:[%s2 + $0x30] sm:$0xff] %v755
  %820 = vst [vmem:[%s2 + $0x38] sm:$0xff] %v756
  %821 = vst [vmem:[%s2 + $0x40] sm:$0xff] %v757
  %822 = vst [vmem:[%s2 + $0x48] sm:$0xff] %v758
  %823 = vst [vmem:[%s2 + $0x50] sm:$0xff] %v759
  %824 = vst [vmem:[%s2 + $0x58] sm:$0xff] %v760
  %825 = vst [vmem:[%s2 + $0x60] sm:$0xff] %v761
  %826 = vst [vmem:[%s2 + $0x68] sm:$0xff] %v762
  %827 = vst [vmem:[%s2 + $0x70] sm:$0xff] %v763
  %828 = vst [vmem:[%s2 + $0x78] sm:$0xff] %v764
  %829 = vst [vmem:[%s2 + $0x80] sm:$0xff] %v765
  %830 = vst [vmem:[%s2 + $0x88] sm:$0xff] %v766
  %831 = vst [vmem:[%s2 + $0x90] sm:$0xff] %v767
  %832 = vst [vmem:[%s2 + $0x98] sm:$0xff] %v768
  %833 = vst [vmem:[%s2 + $0xa0] sm:$0xff] %v769
  %834 = vst [vmem:[%s2 + $0xa8] sm:$0xff] %v770
  %835 = vst [vmem:[%s2 + $0xb0] sm:$0xff] %v771
  %836 = vst [vmem:[%s2 + $0xb8] sm:$0xff] %v772
  %837 = vst [vmem:[%s2 + $0xc0] sm:$0xff] %v773
  %838 = vst [vmem:[%s2 + $0xc8] sm:$0xff] %v774
  %839 = vst [vmem:[%s2 + $0xd0] sm:$0xff] %v775
  %840 = vst [vmem:[%s2 + $0xd8] sm:$0xff] %v776
  %841 = vst [vmem:[%s2 + $0xe0] sm:$0xff] %v777
  %842 = vst [vmem:[%s2 + $0xe8] sm:$0xff] %v778
  %843 = vst [vmem:[%s2 + $0xf0] sm:$0xff] %v779
  %844 = vst [vmem:[%s2 + $0xf8] sm:$0xff] %v780
  %845 = vst [vmem:[%s2 + $0x100] sm:$0xff] %v781
  %846 = vst [vmem:[%s2 + $0x108] sm:$0xff] %v782
  %847 = vst [vmem:[%s2 + $0x110] sm:$0xff] %v783
  %848 = vst [vmem:[%s2 + $0x118] sm:$0xff] %v784
  %849 = vst [vmem:[%s2 + $0x120] sm:$0xff] %v785
  %850 = vst [vmem:[%s2 + $0x128] sm:$0xff] %v786
  %851 = vst [vmem:[%s2 + $0x130] sm:$0xff] %v787
  %852 = vst [vmem:[%s2 + $0x138] sm:$0xff] %v788
  %853 = vst [vmem:[%s2 + $0x140] sm:$0xff] %v789
  %854 = vst [vmem:[%s2 + $0x148] sm:$0xff] %v790
  %855 = vst [vmem:[%s2 + $0x150] sm:$0xff] %v791
  %856 = vst [vmem:[%s2 + $0x158] sm:$0xff] %v792
  %857 = vst [vmem:[%s2 + $0x160] sm:$0xff] %v793
  %858 = vst [vmem:[%s2 + $0x168] sm:$0xff] %v794
  %859 = vst [vmem:[%s2 + $0x170] sm:$0xff] %v795
  %860 = vst [vmem:[%s2 + $0x178] sm:$0xff] %v796
  %861 = vst [vmem:[%s2 + $0x180] sm:$0xff] %v797
  %862 = vst [vmem:[%s2 + $0x188] sm:$0xff] %v798
  %863 = vst [vmem:[%s2 + $0x190] sm:$0xff] %v799
  %864 = vst [vmem:[%s2 + $0x198] sm:$0xff] %v800
  %865 = vst [vmem:[%s2 + $0x1a0] sm:$0xff] %v801
  %866 = vst [vmem:[%s2 + $0x1a8] sm:$0xff] %v802
  %867 = vst [vmem:[%s2 + $0x1b0] sm:$0xff] %v803
  %868 = vst [vmem:[%s2 + $0x1b8] sm:$0xff] %v804
  %869 = vst [vmem:[%s2 + $0x1c0] sm:$0xff] %v805
  %870 = vst [vmem:[%s2 + $0x1c8] sm:$0xff] %v806
  %871 = vst [vmem:[%s2 + $0x1d0] sm:$0xff] %v807
  %872 = vst [vmem:[%s2 + $0x1d8] sm:$0xff] %v808
  %873 = vst [vmem:[%s2 + $0x1e0] sm:$0xff] %v809
  %874 = vst [vmem:[%s2 + $0x1e8] sm:$0xff] %v810
  %875 = vst [vmem:[%s2 + $0x1f0] sm:$0xff] %v811
  %876 = vst [vmem:[%s2 + $0x1f8] sm:$0xff] %v812
  // Predicated region
  $region10: #{encoder_forward.6} parent=0 // pred_check
    _
  $region11: #{encoder_forward.6} parent=0 // pred_check_branch
    %878 = sbr.rel (0) target = $region13
  $region12: #{encoder_forward.6} parent=0 // pred_region
    _
  $region13: #{encoder_forward.6} parent=0 // pred_fallthru
    _
  // Predicated region
  $region14: #{encoder_forward.6} parent=0 // pred_check
    _
  $region15: #{encoder_forward.6} parent=0 // pred_check_branch
    %880 = sbr.rel (0) target = $region17
  $region16: #{encoder_forward.6} parent=0 // pred_region
    _
  $region17: #{encoder_forward.6} parent=0 // pred_fallthru
    _

// kernel: encoder_forward.7
$region0: #{encoder_forward.7}
  #allocation0 [shape = 'u32[]', space=smem, size = 0x4, offset = 0x4, fixed_abs, tag = 'smem constant byte address 0x4 - core index']
  #allocation1 [shape = 'u32[144,128]{1,0:T(1,128)}', space=vmem, size = 0x12000, scoped, tag = 'internal scratch']
  %s0 = inlined_call_operand.vmem [shape: bf16[128,128], index: 0, kind: input, shape index: {}]
  %s1 = inlined_call_operand.vmem [shape: bf16[128,128], index: 1, kind: input, shape index: {}]
  %s2 = inlined_call_operand.vmem [shape: f32[128,128], index: 2, kind: output, shape index: {0}]
  %s3 = inlined_call_operand.vmem [shape: f32[1,8,128], index: 3, kind: output, shape index: {1}]
  %s4 = inlined_call_operand.vmem [shape: f32[1,8,128], index: 4, kind: output, shape index: {2}]
  %5 = xla_tuple %s2, %s3, %s4
  %s6 = sld [smem:[#allocation0]]
  $region34: #{encoder_forward.7} parent=0
    _
  %s8 = ssub.s32 1, %s6
  %s9 = scalar_select 0, %s8, %s6
  // Predicated region
  $region2: #{encoder_forward.7} parent=0 // pred_check
    _
  $region3: #{encoder_forward.7} parent=0 // pred_check_branch
    %11 = sbr.rel (0) target = $region5
  $region4: #{encoder_forward.7} parent=0 // pred_region
    _
  $region5: #{encoder_forward.7} parent=0 // pred_fallthru
    _
  // Predicated region
  $region6: #{encoder_forward.7} parent=0 // pred_check
    _
  $region7: #{encoder_forward.7} parent=0 // pred_check_branch
    %13 = sbr.rel (0) target = $region9
  $region8: #{encoder_forward.7} parent=0 // pred_region
    _
  $region9: #{encoder_forward.7} parent=0 // pred_fallthru
    _
  %v15 = vld [vmem:[%s0] sm:$0xf]
  %v16 = vld [vmem:[%s0 + $0x4] sm:$0xf]
  %v17 = vld [vmem:[%s0 + $0x8] sm:$0xf]
  %v18 = vld [vmem:[%s0 + $0xc] sm:$0xf]
  %v19 = vld [vmem:[%s0 + $0x10] sm:$0xf]
  %v20 = vld [vmem:[%s0 + $0x14] sm:$0xf]
  %v21 = vld [vmem:[%s0 + $0x18] sm:$0xf]
  %v22 = vld [vmem:[%s0 + $0x1c] sm:$0xf]
  %v23 = vld [vmem:[%s0 + $0x20] sm:$0xf]
  %v24 = vld [vmem:[%s0 + $0x24] sm:$0xf]
  %v25 = vld [vmem:[%s0 + $0x28] sm:$0xf]
  %v26 = vld [vmem:[%s0 + $0x2c] sm:$0xf]
  %v27 = vld [vmem:[%s0 + $0x30] sm:$0xf]
  %v28 = vld [vmem:[%s0 + $0x34] sm:$0xf]
  %v29 = vld [vmem:[%s0 + $0x38] sm:$0xf]
  %v30 = vld [vmem:[%s0 + $0x3c] sm:$0xf]
  %v31 = vld [vmem:[%s1] sm:$0xf]
  %v32 = vld [vmem:[%s1 + $0x4] sm:$0xf]
  %v33 = vld [vmem:[%s1 + $0x8] sm:$0xf]
  %v34 = vld [vmem:[%s1 + $0xc] sm:$0xf]
  %v35 = vld [vmem:[%s1 + $0x10] sm:$0xf]
  %v36 = vld [vmem:[%s1 + $0x14] sm:$0xf]
  %v37 = vld [vmem:[%s1 + $0x18] sm:$0xf]
  %v38 = vld [vmem:[%s1 + $0x1c] sm:$0xf]
  %v39 = vld [vmem:[%s1 + $0x20] sm:$0xf]
  %v40 = vld [vmem:[%s1 + $0x24] sm:$0xf]
  %v41 = vld [vmem:[%s1 + $0x28] sm:$0xf]
  %v42 = vld [vmem:[%s1 + $0x2c] sm:$0xf]
  %v43 = vld [vmem:[%s1 + $0x30] sm:$0xf]
  %v44 = vld [vmem:[%s1 + $0x34] sm:$0xf]
  %v45 = vld [vmem:[%s1 + $0x38] sm:$0xf]
  %v46 = vld [vmem:[%s1 + $0x3c] sm:$0xf]
  %v63 = vunpack.c.l.b16 %v15
  %v64 = vunpack.c.l.b16 %v16
  %v65 = vunpack.c.l.b16 %v17
  %v66 = vunpack.c.l.b16 %v18
  %v67 = vunpack.c.l.b16 %v19
  %v68 = vunpack.c.l.b16 %v20
  %v69 = vunpack.c.l.b16 %v21
  %v70 = vunpack.c.l.b16 %v22
  %v71 = vunpack.c.l.b16 %v23
  %v72 = vunpack.c.l.b16 %v24
  %v73 = vunpack.c.l.b16 %v25
  %v74 = vunpack.c.l.b16 %v26
  %v75 = vunpack.c.l.b16 %v27
  %v76 = vunpack.c.l.b16 %v28
  %v77 = vunpack.c.l.b16 %v29
  %v78 = vunpack.c.l.b16 %v30
  %v79 = vpack.c.b16 %v64, %v63
  %v80 = vpack.c.b16 %v66, %v65
  %v81 = vpack.c.b16 %v68, %v67
  %v82 = vpack.c.b16 %v70, %v69
  %v83 = vpack.c.b16 %v72, %v71
  %v84 = vpack.c.b16 %v74, %v73
  %v85 = vpack.c.b16 %v76, %v75
  %v86 = vpack.c.b16 %v78, %v77
  %v111 = vunpack.c.l.b16 %v31
  %v112 = vunpack.c.l.b16 %v32
  %v113 = vunpack.c.l.b16 %v33
  %v114 = vunpack.c.l.b16 %v34
  %v115 = vunpack.c.l.b16 %v35
  %v116 = vunpack.c.l.b16 %v36
  %v117 = vunpack.c.l.b16 %v37
  %v118 = vunpack.c.l.b16 %v38
  %v119 = vunpack.c.l.b16 %v39
  %v120 = vunpack.c.l.b16 %v40
  %v121 = vunpack.c.l.b16 %v41
  %v122 = vunpack.c.l.b16 %v42
  %v123 = vunpack.c.l.b16 %v43
  %v124 = vunpack.c.l.b16 %v44
  %v125 = vunpack.c.l.b16 %v45
  %v126 = vunpack.c.l.b16 %v46
  %v127 = vpack.c.b16 %v112, %v111
  %v128 = vpack.c.b16 %v114, %v113
  %v129 = vpack.c.b16 %v116, %v115
  %v130 = vpack.c.b16 %v118, %v117
  %v131 = vpack.c.b16 %v120, %v119
  %v132 = vpack.c.b16 %v122, %v121
  %v133 = vpack.c.b16 %v124, %v123
  %v134 = vpack.c.b16 %v126, %v125
  %143 = vmatprep.subr.bf16.mxu0 0
  %144 = vmatpush1.bf16.msra.mxu0 %v127
  %145 = vmatprep.subr.bf16.mxu0 0
  %146 = vmatpush1.bf16.msra.mxu0 %v128
  %147 = vmatprep.subr.bf16.mxu0 0
  %148 = vmatpush1.bf16.msra.mxu0 %v129
  %149 = vmatprep.subr.bf16.mxu0 0
  %150 = vmatpush1.bf16.msra.mxu0 %v130
  %151 = vmatprep.subr.bf16.mxu0 0
  %152 = vmatpush1.bf16.msra.mxu0 %v131
  %153 = vmatprep.subr.bf16.mxu0 0
  %154 = vmatpush1.bf16.msra.mxu0 %v132
  %155 = vmatprep.subr.bf16.mxu0 0
  %156 = vmatpush1.bf16.msra.mxu0 %v133
  %157 = vmatprep.subr.bf16.mxu0 0
  %158 = vmatpush1.bf16.msra.mxu0 %v134
  %159 = vmatprep.subr.bf16.mxu0 0
  %160 = vmatpush1.bf16.msra.mxu0 0
  %161 = vmatprep.subr.bf16.mxu0 0
  %162 = vmatpush1.bf16.msra.mxu0 0
  %163 = vmatprep.subr.bf16.mxu0 0
  %164 = vmatpush1.bf16.msra.mxu0 0
  %165 = vmatprep.subr.bf16.mxu0 0
  %166 = vmatpush1.bf16.msra.mxu0 0
  %167 = vmatprep.subr.bf16.mxu0 0
  %168 = vmatpush1.bf16.msra.mxu0 0
  %169 = vmatprep.subr.bf16.mxu0 0
  %170 = vmatpush1.bf16.msra.mxu0 0
  %171 = vmatprep.subr.bf16.mxu0 0
  %172 = vmatpush1.bf16.msra.mxu0 0
  %173 = vmatprep.subr.bf16.mxu0 0
  %174 = vmatpush1.bf16.msra.mxu0 0
  %175 = vmatprep.mubr.bf16.mxu0 0
  %176 = vmatmul.mubr.bf16.gmra.mrb[0].mxu0 %v79
  %v177 = vpop.f32.mrb[0].mxu0
  %v178 = vadd.f32 0.0, %v177
  %v179 = vpop.f32.mrb[0].mxu0
  %v180 = vpop.f32.mrb[0].mxu0
  %v181 = vadd.f32 0.0, %v180
  %v182 = vpop.f32.mrb[0].mxu0
  %183 = vmatprep.mubr.bf16.mxu0 0
  %184 = vmatmul.mubr.bf16.gmra.mrb[0].mxu0 %v80
  %v185 = vpop.f32.mrb[0].mxu0
  %v186 = vadd.f32 0.0, %v185
  %v187 = vpop.f32.mrb[0].mxu0
  %v188 = vpop.f32.mrb[0].mxu0
  %v189 = vadd.f32 0.0, %v188
  %v190 = vpop.f32.mrb[0].mxu0
  %191 = vmatprep.mubr.bf16.mxu0 0
  %192 = vmatmul.mubr.bf16.gmra.mrb[0].mxu0 %v81
  %v193 = vpop.f32.mrb[0].mxu0
  %v194 = vadd.f32 0.0, %v193
  %v195 = vpop.f32.mrb[0].mxu0
  %v196 = vpop.f32.mrb[0].mxu0
  %v197 = vadd.f32 0.0, %v196
  %v198 = vpop.f32.mrb[0].mxu0
  %199 = vmatprep.mubr.bf16.mxu0 0
  %200 = vmatmul.mubr.bf16.gmra.mrb[0].mxu0 %v82
  %v201 = vpop.f32.mrb[0].mxu0
  %v202 = vadd.f32 0.0, %v201
  %v203 = vpop.f32.mrb[0].mxu0
  %v204 = vpop.f32.mrb[0].mxu0
  %v205 = vadd.f32 0.0, %v204
  %v206 = vpop.f32.mrb[0].mxu0
  %207 = vmatprep.mubr.bf16.mxu0 0
  %208 = vmatmul.mubr.bf16.gmra.mrb[0].mxu0 %v83
  %v209 = vpop.f32.mrb[0].mxu0
  %v210 = vadd.f32 0.0, %v209
  %v211 = vpop.f32.mrb[0].mxu0
  %v212 = vpop.f32.mrb[0].mxu0
  %v213 = vadd.f32 0.0, %v212
  %v214 = vpop.f32.mrb[0].mxu0
  %215 = vmatprep.mubr.bf16.mxu0 0
  %216 = vmatmul.mubr.bf16.gmra.mrb[0].mxu0 %v84
  %v217 = vpop.f32.mrb[0].mxu0
  %v218 = vadd.f32 0.0, %v217
  %v219 = vpop.f32.mrb[0].mxu0
  %v220 = vpop.f32.mrb[0].mxu0
  %v221 = vadd.f32 0.0, %v220
  %v222 = vpop.f32.mrb[0].mxu0
  %223 = vmatprep.mubr.bf16.mxu0 0
  %224 = vmatmul.mubr.bf16.gmra.mrb[0].mxu0 %v85
  %v225 = vpop.f32.mrb[0].mxu0
  %v226 = vadd.f32 0.0, %v225
  %v227 = vpop.f32.mrb[0].mxu0
  %v228 = vpop.f32.mrb[0].mxu0
  %v229 = vadd.f32 0.0, %v228
  %v230 = vpop.f32.mrb[0].mxu0
  %231 = vmatprep.mubr.bf16.mxu0 0
  %232 = vmatmul.mubr.bf16.gmra.mrb[0].mxu0 %v86
  %v233 = vpop.f32.mrb[0].mxu0
  %v234 = vadd.f32 0.0, %v233
  %v235 = vpop.f32.mrb[0].mxu0
  %v236 = vpop.f32.mrb[0].mxu0
  %v237 = vadd.f32 0.0, %v236
  %v238 = vpop.f32.mrb[0].mxu0
  %239 = vdwg.mxu0
  %240 = vst [vmem:[%s2] sm:$0xff] %v178
  %241 = vst [vmem:[%s2 + $0x8] sm:$0xff] %v181
  %242 = vst [vmem:[%s2 + $0x10] sm:$0xff] %v186
  %243 = vst [vmem:[%s2 + $0x18] sm:$0xff] %v189
  %244 = vst [vmem:[%s2 + $0x20] sm:$0xff] %v194
  %245 = vst [vmem:[%s2 + $0x28] sm:$0xff] %v197
  %246 = vst [vmem:[%s2 + $0x30] sm:$0xff] %v202
  %247 = vst [vmem:[%s2 + $0x38] sm:$0xff] %v205
  %248 = vst [vmem:[%s2 + $0x40] sm:$0xff] %v210
  %249 = vst [vmem:[%s2 + $0x48] sm:$0xff] %v213
  %250 = vst [vmem:[%s2 + $0x50] sm:$0xff] %v218
  %251 = vst [vmem:[%s2 + $0x58] sm:$0xff] %v221
  %252 = vst [vmem:[%s2 + $0x60] sm:$0xff] %v226
  %253 = vst [vmem:[%s2 + $0x68] sm:$0xff] %v229
  %254 = vst [vmem:[%s2 + $0x70] sm:$0xff] %v234
  %255 = vst [vmem:[%s2 + $0x78] sm:$0xff] %v237
  %v256 = vadd.f32 %v178, %v181
  %v257 = vadd.f32 %v256, %v186
  %v258 = vadd.f32 %v257, %v189
  %v259 = vadd.f32 %v258, %v194
  %v260 = vadd.f32 %v259, %v197
  %v261 = vadd.f32 %v260, %v202
  %v262 = vadd.f32 %v261, %v205
  %v263 = vadd.f32 %v262, %v210
  %v264 = vadd.f32 %v263, %v213
  %v265 = vadd.f32 %v264, %v218
  %v266 = vadd.f32 %v265, %v221
  %v267 = vadd.f32 %v266, %v226
  %v268 = vadd.f32 %v267, %v229
  %v269 = vadd.f32 %v268, %v234
  %v270 = vadd.f32 %v269, %v237
  %v271 = vrot.slane %v270, 4
  %v272 = vadd.f32 %v270, %v271
  %v273 = vrot.slane %v272, 2
  %v274 = vadd.f32 %v272, %v273
  %v275 = vrot.slane %v274, 1
  %v276 = vadd.f32 %v274, %v275
  %v277 = vmul.f32 %v178, %v178
  %v278 = vmul.f32 %v181, %v181
  %v279 = vmul.f32 %v186, %v186
  %v280 = vmul.f32 %v189, %v189
  %v281 = vmul.f32 %v194, %v194
  %v282 = vmul.f32 %v197, %v197
  %v283 = vmul.f32 %v202, %v202
  %v284 = vmul.f32 %v205, %v205
  %v285 = vmul.f32 %v210, %v210
  %v286 = vmul.f32 %v213, %v213
  %v287 = vmul.f32 %v218, %v218
  %v288 = vmul.f32 %v221, %v221
  %v289 = vmul.f32 %v226, %v226
  %v290 = vmul.f32 %v229, %v229
  %v291 = vmul.f32 %v234, %v234
  %v292 = vmul.f32 %v237, %v237
  %v293 = vadd.f32 %v277, %v278
  %v294 = vadd.f32 %v293, %v279
  %v295 = vadd.f32 %v294, %v280
  %v296 = vadd.f32 %v295, %v281
  %v297 = vadd.f32 %v296, %v282
  %v298 = vadd.f32 %v297, %v283
  %v299 = vadd.f32 %v298, %v284
  %v300 = vadd.f32 %v299, %v285
  %v301 = vadd.f32 %v300, %v286
  %v302 = vadd.f32 %v301, %v287
  %v303 = vadd.f32 %v302, %v288
  %v304 = vadd.f32 %v303, %v289
  %v305 = vadd.f32 %v304, %v290
  %v306 = vadd.f32 %v305, %v291
  %v307 = vadd.f32 %v306, %v292
  %v308 = vrot.slane %v307, 4
  %v309 = vadd.f32 %v307, %v308
  %v310 = vrot.slane %v309, 2
  %v311 = vadd.f32 %v309, %v310
  %v312 = vrot.slane %v311, 1
  %v313 = vadd.f32 %v311, %v312
  %314 = vst [vmem:[%s3] sm:$0xff] %v276
  %315 = vst [vmem:[%s4] sm:$0xff] %v313
  // Predicated region
  $region10: #{encoder_forward.7} parent=0 // pred_check
    _
  $region11: #{encoder_forward.7} parent=0 // pred_check_branch
    %317 = sbr.rel (0) target = $region13
  $region12: #{encoder_forward.7} parent=0 // pred_region
    _
  $region13: #{encoder_forward.7} parent=0 // pred_fallthru
    _
  // Predicated region
  $region14: #{encoder_forward.7} parent=0 // pred_check
    _
  $region15: #{encoder_forward.7} parent=0 // pred_check_branch
    %319 = sbr.rel (0) target = $region17
  $region16: #{encoder_forward.7} parent=0 // pred_region
    _
  $region17: #{encoder_forward.7} parent=0 // pred_fallthru
    _
  // Predicated region
  $region18: #{encoder_forward.7} parent=0 // pred_check
    _
  $region19: #{encoder_forward.7} parent=0 // pred_check_branch
    %321 = sbr.rel (0) target = $region21
  $region20: #{encoder_forward.7} parent=0 // pred_region
    _
  $region21: #{encoder_forward.7} parent=0 // pred_fallthru
    _
  // Predicated region
  $region22: #{encoder_forward.7} parent=0 // pred_check
    _
  $region23: #{encoder_forward.7} parent=0 // pred_check_branch
    %323 = sbr.rel (0) target = $region25
  $region24: #{encoder_forward.7} parent=0 // pred_region
    _
  $region25: #{encoder_forward.7} parent=0 // pred_fallthru
    _
  // Predicated region
  $region26: #{encoder_forward.7} parent=0 // pred_check
    _
  $region27: #{encoder_forward.7} parent=0 // pred_check_branch
    %325 = sbr.rel (0) target = $region29
  $region28: #{encoder_forward.7} parent=0 // pred_region
    _
  $region29: #{encoder_forward.7} parent=0 // pred_fallthru
    _
  // Predicated region
  $region30: #{encoder_forward.7} parent=0 // pred_check
    _
  $region31: #{encoder_forward.7} parent=0 // pred_check_branch
    %327 = sbr.rel (0) target = $region33
  $region32: #{encoder_forward.7} parent=0 // pred_region
    _
  $region33: #{encoder_forward.7} parent=0 // pred_fallthru
    _

// kernel: encoder_forward.8
$region0: #{encoder_forward.8}
  #allocation0 [shape = 'u32[]', space=smem, size = 0x4, offset = 0x4, fixed_abs, tag = 'smem constant byte address 0x4 - core index']
  #allocation1 [shape = 'u32[144,128]{1,0:T(1,128)}', space=vmem, size = 0x12000, scoped, tag = 'internal scratch']
  %s0 = inlined_call_operand.vmem [shape: f32[128,128], index: 0, kind: input, shape index: {}]
  %s1 = inlined_call_operand.vmem [shape: f32[1,128], index: 1, kind: input, shape index: {}]
  %s2 = inlined_call_operand.vmem [shape: f32[1,128], index: 2, kind: input, shape index: {}]
  %s3 = inlined_call_operand.vmem [shape: f32[128,128], index: 3, kind: output, shape index: {}]
  %s4 = sld [smem:[#allocation0]]
  $region22: #{encoder_forward.8} parent=0
    _
  %s6 = ssub.s32 1, %s4
  %s7 = scalar_select 0, %s6, %s4
  // Predicated region
  $region2: #{encoder_forward.8} parent=0 // pred_check
    _
  $region3: #{encoder_forward.8} parent=0 // pred_check_branch
    %9 = sbr.rel (0) target = $region5
  $region4: #{encoder_forward.8} parent=0 // pred_region
    _
  $region5: #{encoder_forward.8} parent=0 // pred_fallthru
    _
  // Predicated region
  $region6: #{encoder_forward.8} parent=0 // pred_check
    _
  $region7: #{encoder_forward.8} parent=0 // pred_check_branch
    %11 = sbr.rel (0) target = $region9
  $region8: #{encoder_forward.8} parent=0 // pred_region
    _
  $region9: #{encoder_forward.8} parent=0 // pred_fallthru
    _
  // Predicated region
  $region10: #{encoder_forward.8} parent=0 // pred_check
    _
  $region11: #{encoder_forward.8} parent=0 // pred_check_branch
    %13 = sbr.rel (0) target = $region13
  $region12: #{encoder_forward.8} parent=0 // pred_region
    _
  $region13: #{encoder_forward.8} parent=0 // pred_fallthru
    _
  %v14 = vld [vmem:[%s0] sm:$0xff]
  %v15 = vld [vmem:[%s0 + $0x8] sm:$0xff]
  %v16 = vld [vmem:[%s0 + $0x10] sm:$0xff]
  %v17 = vld [vmem:[%s0 + $0x18] sm:$0xff]
  %v18 = vld [vmem:[%s0 + $0x20] sm:$0xff]
  %v19 = vld [vmem:[%s0 + $0x28] sm:$0xff]
  %v20 = vld [vmem:[%s0 + $0x30] sm:$0xff]
  %v21 = vld [vmem:[%s0 + $0x38] sm:$0xff]
  %v22 = vld [vmem:[%s0 + $0x40] sm:$0xff]
  %v23 = vld [vmem:[%s0 + $0x48] sm:$0xff]
  %v24 = vld [vmem:[%s0 + $0x50] sm:$0xff]
  %v25 = vld [vmem:[%s0 + $0x58] sm:$0xff]
  %v26 = vld [vmem:[%s0 + $0x60] sm:$0xff]
  %v27 = vld [vmem:[%s0 + $0x68] sm:$0xff]
  %v28 = vld [vmem:[%s0 + $0x70] sm:$0xff]
  %v29 = vld [vmem:[%s0 + $0x78] sm:$0xff]
  %v30 = vld [vmem:[%s1] sm:$0x1]
  %v32 = vlaneseq
  %v33 = vshrl.u32 %v32, 7
  %v34 = vsub.s32 0, %v33
  %v35 = vrot.slane %v30, %v34
  %v37 = vmul.f32 %v14, %v35
  %v38 = vmul.f32 %v15, %v35
  %v39 = vmul.f32 %v16, %v35
  %v40 = vmul.f32 %v17, %v35
  %v41 = vmul.f32 %v18, %v35
  %v42 = vmul.f32 %v19, %v35
  %v43 = vmul.f32 %v20, %v35
  %v44 = vmul.f32 %v21, %v35
  %v45 = vmul.f32 %v22, %v35
  %v46 = vmul.f32 %v23, %v35
  %v47 = vmul.f32 %v24, %v35
  %v48 = vmul.f32 %v25, %v35
  %v49 = vmul.f32 %v26, %v35
  %v50 = vmul.f32 %v27, %v35
  %v51 = vmul.f32 %v28, %v35
  %v52 = vmul.f32 %v29, %v35
  %v53 = vld [vmem:[%s2] sm:$0x1]
  %v55 = vlaneseq
  %v56 = vshrl.u32 %v55, 7
  %v57 = vsub.s32 0, %v56
  %v58 = vrot.slane %v53, %v57
  %v60 = vadd.f32 %v37, %v58
  %v61 = vadd.f32 %v38, %v58
  %v62 = vadd.f32 %v39, %v58
  %v63 = vadd.f32 %v40, %v58
  %v64 = vadd.f32 %v41, %v58
  %v65 = vadd.f32 %v42, %v58
  %v66 = vadd.f32 %v43, %v58
  %v67 = vadd.f32 %v44, %v58
  %v68 = vadd.f32 %v45, %v58
  %v69 = vadd.f32 %v46, %v58
  %v70 = vadd.f32 %v47, %v58
  %v71 = vadd.f32 %v48, %v58
  %v72 = vadd.f32 %v49, %v58
  %v73 = vadd.f32 %v50, %v58
  %v74 = vadd.f32 %v51, %v58
  %v75 = vadd.f32 %v52, %v58
  %vm76 = vcmp.ge.f32.partialorder %v60, 0.0
  %vm77 = vcmp.ge.f32.partialorder %v61, 0.0
  %vm78 = vcmp.ge.f32.partialorder %v62, 0.0
  %vm79 = vcmp.ge.f32.partialorder %v63, 0.0
  %vm80 = vcmp.ge.f32.partialorder %v64, 0.0
  %vm81 = vcmp.ge.f32.partialorder %v65, 0.0
  %vm82 = vcmp.ge.f32.partialorder %v66, 0.0
  %vm83 = vcmp.ge.f32.partialorder %v67, 0.0
  %vm84 = vcmp.ge.f32.partialorder %v68, 0.0
  %vm85 = vcmp.ge.f32.partialorder %v69, 0.0
  %vm86 = vcmp.ge.f32.partialorder %v70, 0.0
  %vm87 = vcmp.ge.f32.partialorder %v71, 0.0
  %vm88 = vcmp.ge.f32.partialorder %v72, 0.0
  %vm89 = vcmp.ge.f32.partialorder %v73, 0.0
  %vm90 = vcmp.ge.f32.partialorder %v74, 0.0
  %vm91 = vcmp.ge.f32.partialorder %v75, 0.0
  %v92 = vmul.f32 %v60, 0.2
  %v93 = vmul.f32 %v61, 0.2
  %v94 = vmul.f32 %v62, 0.2
  %v95 = vmul.f32 %v63, 0.2
  %v96 = vmul.f32 %v64, 0.2
  %v97 = vmul.f32 %v65, 0.2
  %v98 = vmul.f32 %v66, 0.2
  %v99 = vmul.f32 %v67, 0.2
  %v100 = vmul.f32 %v68, 0.2
  %v101 = vmul.f32 %v69, 0.2
  %v102 = vmul.f32 %v70, 0.2
  %v103 = vmul.f32 %v71, 0.2
  %v104 = vmul.f32 %v72, 0.2
  %v105 = vmul.f32 %v73, 0.2
  %v106 = vmul.f32 %v74, 0.2
  %v107 = vmul.f32 %v75, 0.2
  %v108 = vsel %vm76, %v60, %v92
  %v109 = vsel %vm77, %v61, %v93
  %v110 = vsel %vm78, %v62, %v94
  %v111 = vsel %vm79, %v63, %v95
  %v112 = vsel %vm80, %v64, %v96
  %v113 = vsel %vm81, %v65, %v97
  %v114 = vsel %vm82, %v66, %v98
  %v115 = vsel %vm83, %v67, %v99
  %v116 = vsel %vm84, %v68, %v100
  %v117 = vsel %vm85, %v69, %v101
  %v118 = vsel %vm86, %v70, %v102
  %v119 = vsel %vm87, %v71, %v103
  %v120 = vsel %vm88, %v72, %v104
  %v121 = vsel %vm89, %v73, %v105
  %v122 = vsel %vm90, %v74, %v106
  %v123 = vsel %vm91, %v75, %v107
  %124 = vst [vmem:[%s3] sm:$0xff] %v108
  %125 = vst [vmem:[%s3 + $0x8] sm:$0xff] %v109
  %126 = vst [vmem:[%s3 + $0x10] sm:$0xff] %v110
  %127 = vst [vmem:[%s3 + $0x18] sm:$0xff] %v111
  %128 = vst [vmem:[%s3 + $0x20] sm:$0xff] %v112
  %129 = vst [vmem:[%s3 + $0x28] sm:$0xff] %v113
  %130 = vst [vmem:[%s3 + $0x30] sm:$0xff] %v114
  %131 = vst [vmem:[%s3 + $0x38] sm:$0xff] %v115
  %132 = vst [vmem:[%s3 + $0x40] sm:$0xff] %v116
  %133 = vst [vmem:[%s3 + $0x48] sm:$0xff] %v117
  %134 = vst [vmem:[%s3 + $0x50] sm:$0xff] %v118
  %135 = vst [vmem:[%s3 + $0x58] sm:$0xff] %v119
  %136 = vst [vmem:[%s3 + $0x60] sm:$0xff] %v120
  %137 = vst [vmem:[%s3 + $0x68] sm:$0xff] %v121
  %138 = vst [vmem:[%s3 + $0x70] sm:$0xff] %v122
  %139 = vst [vmem:[%s3 + $0x78] sm:$0xff] %v123
  // Predicated region
  $region14: #{encoder_forward.8} parent=0 // pred_check
    _
  $region15: #{encoder_forward.8} parent=0 // pred_check_branch
    %141 = sbr.rel (0) target = $region17
  $region16: #{encoder_forward.8} parent=0 // pred_region
    _
  $region17: #{encoder_forward.8} parent=0 // pred_fallthru
    _
  // Predicated region
  $region18: #{encoder_forward.8} parent=0 // pred_check
    _
  $region19: #{encoder_forward.8} parent=0 // pred_check_branch
    %143 = sbr.rel (0) target = $region21
  $region20: #{encoder_forward.8} parent=0 // pred_region
    _
  $region21: #{encoder_forward.8} parent=0 // pred_fallthru
    _

// kernel: encoder_forward.10
$region0: #{encoder_forward.10}
  #allocation0 [shape = 'u32[]', space=smem, size = 0x4, offset = 0x4, fixed_abs, tag = 'smem constant byte address 0x4 - core index']
  #allocation1 [shape = 'u32[144,128]{1,0:T(1,128)}', space=vmem, size = 0x12000, scoped, tag = 'internal scratch']
  %s0 = inlined_call_operand.vmem [shape: f32[24,128], index: 0, kind: input, shape index: {}]
  %s1 = inlined_call_operand.vmem [shape: f32[1,128], index: 1, kind: input, shape index: {}]
  %s2 = inlined_call_operand.vmem [shape: f32[1,128], index: 2, kind: input, shape index: {}]
  %s3 = inlined_call_operand.vmem [shape: f32[24,128], index: 3, kind: output, shape index: {}]
  %s4 = sld [smem:[#allocation0]]
  $region22: #{encoder_forward.10} parent=0
    _
  %s6 = ssub.s32 1, %s4
  %s7 = scalar_select 0, %s6, %s4
  // Predicated region
  $region2: #{encoder_forward.10} parent=0 // pred_check
    _
  $region3: #{encoder_forward.10} parent=0 // pred_check_branch
    %9 = sbr.rel (0) target = $region5
  $region4: #{encoder_forward.10} parent=0 // pred_region
    _
  $region5: #{encoder_forward.10} parent=0 // pred_fallthru
    _
  // Predicated region
  $region6: #{encoder_forward.10} parent=0 // pred_check
    _
  $region7: #{encoder_forward.10} parent=0 // pred_check_branch
    %11 = sbr.rel (0) target = $region9
  $region8: #{encoder_forward.10} parent=0 // pred_region
    _
  $region9: #{encoder_forward.10} parent=0 // pred_fallthru
    _
  // Predicated region
  $region10: #{encoder_forward.10} parent=0 // pred_check
    _
  $region11: #{encoder_forward.10} parent=0 // pred_check_branch
    %13 = sbr.rel (0) target = $region13
  $region12: #{encoder_forward.10} parent=0 // pred_region
    _
  $region13: #{encoder_forward.10} parent=0 // pred_fallthru
    _
  %v14 = vld [vmem:[%s0] sm:$0xff]
  %v15 = vld [vmem:[%s0 + $0x8] sm:$0xff]
  %v16 = vld [vmem:[%s0 + $0x10] sm:$0xff]
  %v17 = vld [vmem:[%s1] sm:$0x1]
  %v19 = vlaneseq
  %v20 = vshrl.u32 %v19, 7
  %v21 = vsub.s32 0, %v20
  %v22 = vrot.slane %v17, %v21
  %v24 = vmul.f32 %v14, %v22
  %v25 = vmul.f32 %v15, %v22
  %v26 = vmul.f32 %v16, %v22
  %v27 = vld [vmem:[%s2] sm:$0x1]
  %v29 = vlaneseq
  %v30 = vshrl.u32 %v29, 7
  %v31 = vsub.s32 0, %v30
  %v32 = vrot.slane %v27, %v31
  %v34 = vadd.f32 %v24, %v32
  %v35 = vadd.f32 %v25, %v32
  %v36 = vadd.f32 %v26, %v32
  %vm37 = vcmp.ge.f32.partialorder %v34, 0.0
  %vm38 = vcmp.ge.f32.partialorder %v35, 0.0
  %vm39 = vcmp.ge.f32.partialorder %v36, 0.0
  %v40 = vmul.f32 %v34, 0.2
  %v41 = vmul.f32 %v35, 0.2
  %v42 = vmul.f32 %v36, 0.2
  %v43 = vsel %vm37, %v34, %v40
  %v44 = vsel %vm38, %v35, %v41
  %v45 = vsel %vm39, %v36, %v42
  %46 = vst [vmem:[%s3] sm:$0xff] %v43
  %47 = vst [vmem:[%s3 + $0x8] sm:$0xff] %v44
  %48 = vst [vmem:[%s3 + $0x10] sm:$0xff] %v45
  // Predicated region
  $region14: #{encoder_forward.10} parent=0 // pred_check
    _
  $region15: #{encoder_forward.10} parent=0 // pred_check_branch
    %50 = sbr.rel (0) target = $region17
  $region16: #{encoder_forward.10} parent=0 // pred_region
    _
  $region17: #{encoder_forward.10} parent=0 // pred_fallthru
    _
  // Predicated region
  $region18: #{encoder_forward.10} parent=0 // pred_check
    _
  $region19: #{encoder_forward.10} parent=0 // pred_check_branch
    %52 = sbr.rel (0) target = $region21
  $region20: #{encoder_forward.10} parent=0 // pred_region
    _
  $region21: #{encoder_forward.10} parent=0 // pred_fallthru
    _

// kernel: encoder_forward.9
$region0: #{encoder_forward.9}
  #allocation0 [shape = 'u32[]', space=smem, size = 0x4, offset = 0x4, fixed_abs, tag = 'smem constant byte address 0x4 - core index']
  #allocation1 [shape = 'u32[144,128]{1,0:T(1,128)}', space=vmem, size = 0x12000, scoped, tag = 'internal scratch']
  %s0 = inlined_call_operand.vmem [shape: bf16[24,256], index: 0, kind: input, shape index: {}]
  %s1 = inlined_call_operand.vmem [shape: bf16[256,128], index: 1, kind: input, shape index: {}]
  %s2 = inlined_call_operand.vmem [shape: f32[24,128], index: 2, kind: output, shape index: {0}]
  %s3 = inlined_call_operand.vmem [shape: f32[1,8,128], index: 3, kind: output, shape index: {1}]
  %s4 = inlined_call_operand.vmem [shape: f32[1,8,128], index: 4, kind: output, shape index: {2}]
  %5 = xla_tuple %s2, %s3, %s4
  %s6 = sld [smem:[#allocation0]]
  $region34: #{encoder_forward.9} parent=0
    _
  %s8 = ssub.s32 1, %s6
  %s9 = scalar_select 0, %s8, %s6
  // Predicated region
  $region2: #{encoder_forward.9} parent=0 // pred_check
    _
  $region3: #{encoder_forward.9} parent=0 // pred_check_branch
    %11 = sbr.rel (0) target = $region5
  $region4: #{encoder_forward.9} parent=0 // pred_region
    _
  $region5: #{encoder_forward.9} parent=0 // pred_fallthru
    _
  // Predicated region
  $region6: #{encoder_forward.9} parent=0 // pred_check
    _
  $region7: #{encoder_forward.9} parent=0 // pred_check_branch
    %13 = sbr.rel (0) target = $region9
  $region8: #{encoder_forward.9} parent=0 // pred_region
    _
  $region9: #{encoder_forward.9} parent=0 // pred_fallthru
    _
  %v15 = vld [vmem:[%s0] sm:$0xff]
  %v16 = vld [vmem:[%s0 + $0x8] sm:$0xff]
  %v17 = vld [vmem:[%s0 + $0x10] sm:$0xff]
  %v18 = vld [vmem:[%s1] sm:$0xf]
  %v19 = vld [vmem:[%s1 + $0x4] sm:$0xf]
  %v20 = vld [vmem:[%s1 + $0x8] sm:$0xf]
  %v21 = vld [vmem:[%s1 + $0xc] sm:$0xf]
  %v22 = vld [vmem:[%s1 + $0x10] sm:$0xf]
  %v23 = vld [vmem:[%s1 + $0x14] sm:$0xf]
  %v24 = vld [vmem:[%s1 + $0x18] sm:$0xf]
  %v25 = vld [vmem:[%s1 + $0x1c] sm:$0xf]
  %v26 = vld [vmem:[%s1 + $0x20] sm:$0xf]
  %v27 = vld [vmem:[%s1 + $0x24] sm:$0xf]
  %v28 = vld [vmem:[%s1 + $0x28] sm:$0xf]
  %v29 = vld [vmem:[%s1 + $0x2c] sm:$0xf]
  %v30 = vld [vmem:[%s1 + $0x30] sm:$0xf]
  %v31 = vld [vmem:[%s1 + $0x34] sm:$0xf]
  %v32 = vld [vmem:[%s1 + $0x38] sm:$0xf]
  %v33 = vld [vmem:[%s1 + $0x3c] sm:$0xf]
  %v34 = vld [vmem:[%s1 + $0x40] sm:$0xf]
  %v35 = vld [vmem:[%s1 + $0x44] sm:$0xf]
  %v36 = vld [vmem:[%s1 + $0x48] sm:$0xf]
  %v37 = vld [vmem:[%s1 + $0x4c] sm:$0xf]
  %v38 = vld [vmem:[%s1 + $0x50] sm:$0xf]
  %v39 = vld [vmem:[%s1 + $0x54] sm:$0xf]
  %v40 = vld [vmem:[%s1 + $0x58] sm:$0xf]
  %v41 = vld [vmem:[%s1 + $0x5c] sm:$0xf]
  %v42 = vld [vmem:[%s1 + $0x60] sm:$0xf]
  %v43 = vld [vmem:[%s1 + $0x64] sm:$0xf]
  %v44 = vld [vmem:[%s1 + $0x68] sm:$0xf]
  %v45 = vld [vmem:[%s1 + $0x6c] sm:$0xf]
  %v46 = vld [vmem:[%s1 + $0x70] sm:$0xf]
  %v47 = vld [vmem:[%s1 + $0x74] sm:$0xf]
  %v48 = vld [vmem:[%s1 + $0x78] sm:$0xf]
  %v49 = vld [vmem:[%s1 + $0x7c] sm:$0xf]
  %v53 = vunpack.c.l.b16 %v15
  %v54 = vunpack.c.h.b16 %v15
  %v55 = vunpack.c.l.b16 %v16
  %v56 = vunpack.c.h.b16 %v16
  %v57 = vunpack.c.l.b16 %v17
  %v58 = vunpack.c.h.b16 %v17
  %v59 = vpack.c.b16 %v55, %v53
  %v60 = vpack.c.b16 %v56, %v54
  %v61 = vpack.c.b16 %v57, %v57
  %v62 = vpack.c.b16 %v58, %v58
  %v99 = vunpack.c.l.b16 %v18
  %v100 = vunpack.c.l.b16 %v19
  %v101 = vunpack.c.l.b16 %v20
  %v102 = vunpack.c.l.b16 %v21
  %v103 = vunpack.c.l.b16 %v22
  %v104 = vunpack.c.l.b16 %v23
  %v105 = vunpack.c.l.b16 %v24
  %v106 = vunpack.c.l.b16 %v25
  %v107 = vunpack.c.l.b16 %v26
  %v108 = vunpack.c.l.b16 %v27
  %v109 = vunpack.c.l.b16 %v28
  %v110 = vunpack.c.l.b16 %v29
  %v111 = vunpack.c.l.b16 %v30
  %v112 = vunpack.c.l.b16 %v31
  %v113 = vunpack.c.l.b16 %v32
  %v114 = vunpack.c.l.b16 %v33
  %v115 = vunpack.c.l.b16 %v34
  %v116 = vunpack.c.l.b16 %v35
  %v117 = vunpack.c.l.b16 %v36
  %v118 = vunpack.c.l.b16 %v37
  %v119 = vunpack.c.l.b16 %v38
  %v120 = vunpack.c.l.b16 %v39
  %v121 = vunpack.c.l.b16 %v40
  %v122 = vunpack.c.l.b16 %v41
  %v123 = vunpack.c.l.b16 %v42
  %v124 = vunpack.c.l.b16 %v43
  %v125 = vunpack.c.l.b16 %v44
  %v126 = vunpack.c.l.b16 %v45
  %v127 = vunpack.c.l.b16 %v46
  %v128 = vunpack.c.l.b16 %v47
  %v129 = vunpack.c.l.b16 %v48
  %v130 = vunpack.c.l.b16 %v49
  %v131 = vpack.c.b16 %v100, %v99
  %v132 = vpack.c.b16 %v102, %v101
  %v133 = vpack.c.b16 %v104, %v103
  %v134 = vpack.c.b16 %v106, %v105
  %v135 = vpack.c.b16 %v108, %v107
  %v136 = vpack.c.b16 %v110, %v109
  %v137 = vpack.c.b16 %v112, %v111
  %v138 = vpack.c.b16 %v114, %v113
  %v139 = vpack.c.b16 %v116, %v115
  %v140 = vpack.c.b16 %v118, %v117
  %v141 = vpack.c.b16 %v120, %v119
  %v142 = vpack.c.b16 %v122, %v121
  %v143 = vpack.c.b16 %v124, %v123
  %v144 = vpack.c.b16 %v126, %v125
  %v145 = vpack.c.b16 %v128, %v127
  %v146 = vpack.c.b16 %v130, %v129
  %163 = vmatprep.subr.bf16.mxu0 0
  %164 = vmatpush1.bf16.msra.mxu0 %v131
  %165 = vmatprep.subr.bf16.mxu0 0
  %166 = vmatpush1.bf16.msra.mxu0 %v132
  %167 = vmatprep.subr.bf16.mxu0 0
  %168 = vmatpush1.bf16.msra.mxu0 %v133
  %169 = vmatprep.subr.bf16.mxu0 0
  %170 = vmatpush1.bf16.msra.mxu0 %v134
  %171 = vmatprep.subr.bf16.mxu0 0
  %172 = vmatpush1.bf16.msra.mxu0 %v135
  %173 = vmatprep.subr.bf16.mxu0 0
  %174 = vmatpush1.bf16.msra.mxu0 %v136
  %175 = vmatprep.subr.bf16.mxu0 0
  %176 = vmatpush1.bf16.msra.mxu0 %v137
  %177 = vmatprep.subr.bf16.mxu0 0
  %178 = vmatpush1.bf16.msra.mxu0 %v138
  %179 = vmatprep.subr.bf16.mxu0 0
  %180 = vmatpush1.bf16.msra.mxu0 %v139
  %181 = vmatprep.subr.bf16.mxu0 0
  %182 = vmatpush1.bf16.msra.mxu0 %v140
  %183 = vmatprep.subr.bf16.mxu0 0
  %184 = vmatpush1.bf16.msra.mxu0 %v141
  %185 = vmatprep.subr.bf16.mxu0 0
  %186 = vmatpush1.bf16.msra.mxu0 %v142
  %187 = vmatprep.subr.bf16.mxu0 0
  %188 = vmatpush1.bf16.msra.mxu0 %v143
  %189 = vmatprep.subr.bf16.mxu0 0
  %190 = vmatpush1.bf16.msra.mxu0 %v144
  %191 = vmatprep.subr.bf16.mxu0 0
  %192 = vmatpush1.bf16.msra.mxu0 %v145
  %193 = vmatprep.subr.bf16.mxu0 0
  %194 = vmatpush1.bf16.msra.mxu0 %v146
  %195 = vmatprep.mubr.bf16.mxu0 %v60
  %196 = vmatmul.mubr.bf16.gmra.mrb[0].mxu0 %v59
  %v197 = vpop.f32.mrb[0].mxu0
  %v198 = vadd.f32 0.0, %v197
  %v199 = vpop.f32.mrb[0].mxu0
  %v200 = vpop.f32.mrb[0].mxu0
  %v201 = vadd.f32 0.0, %v200
  %v202 = vpop.f32.mrb[0].mxu0
  %203 = vmatprep.mubr.bf16.mxu0 %v62
  %204 = vmatmul.mubr.bf16.gmra.mrb[0].mxu0 %v61
  %v205 = vpop.f32.mrb[0].mxu0
  %v206 = vadd.f32 0.0, %v205
  %v207 = vpop.f32.mrb[0].mxu0
  %v208 = vpop.f32.mrb[0].mxu0
  %v209 = vpop.f32.mrb[0].mxu0
  %210 = vdwg.mxu0
  %211 = vst [vmem:[%s2] sm:$0xff] %v198
  %212 = vst [vmem:[%s2 + $0x8] sm:$0xff] %v201
  %213 = vst [vmem:[%s2 + $0x10] sm:$0xff] %v206
  %v214 = vadd.f32 %v198, %v201
  %v215 = vadd.f32 %v214, %v206
  %v216 = vrot.slane %v215, 4
  %v217 = vadd.f32 %v215, %v216
  %v218 = vrot.slane %v217, 2
  %v219 = vadd.f32 %v217, %v218
  %v220 = vrot.slane %v219, 1
  %v221 = vadd.f32 %v219, %v220
  %v222 = vmul.f32 %v198, %v198
  %v223 = vmul.f32 %v201, %v201
  %v224 = vmul.f32 %v206, %v206
  %v225 = vadd.f32 %v222, %v223
  %v226 = vadd.f32 %v225, %v224
  %v227 = vrot.slane %v226, 4
  %v228 = vadd.f32 %v226, %v227
  %v229 = vrot.slane %v228, 2
  %v230 = vadd.f32 %v228, %v229
  %v231 = vrot.slane %v230, 1
  %v232 = vadd.f32 %v230, %v231
  %233 = vst [vmem:[%s3] sm:$0xff] %v221
  %234 = vst [vmem:[%s4] sm:$0xff] %v232
  // Predicated region
  $region10: #{encoder_forward.9} parent=0 // pred_check
    _
  $region11: #{encoder_forward.9} parent=0 // pred_check_branch
    %236 = sbr.rel (0) target = $region13
  $region12: #{encoder_forward.9} parent=0 // pred_region
    _
  $region13: #{encoder_forward.9} parent=0 // pred_fallthru
    _
  // Predicated region
  $region14: #{encoder_forward.9} parent=0 // pred_check
    _
  $region15: #{encoder_forward.9} parent=0 // pred_check_branch
    %238 = sbr.rel (0) target = $region17
  $region16: #{encoder_forward.9} parent=0 // pred_region
    _
  $region17: #{encoder_forward.9} parent=0 // pred_fallthru
    _
  // Predicated region
  $region18: #{encoder_forward.9} parent=0 // pred_check
    _
  $region19: #{encoder_forward.9} parent=0 // pred_check_branch
    %240 = sbr.rel (0) target = $region21
  $region20: #{encoder_forward.9} parent=0 // pred_region
    _
  $region21: #{encoder_forward.9} parent=0 // pred_fallthru
    _
  // Predicated region
  $region22: #{encoder_forward.9} parent=0 // pred_check
    _
  $region23: #{encoder_forward.9} parent=0 // pred_check_branch
    %242 = sbr.rel (0) target = $region25
  $region24: #{encoder_forward.9} parent=0 // pred_region
    _
  $region25: #{encoder_forward.9} parent=0 // pred_fallthru
    _
  // Predicated region
  $region26: #{encoder_forward.9} parent=0 // pred_check
    _
  $region27: #{encoder_forward.9} parent=0 // pred_check_branch
    %244 = sbr.rel (0) target = $region29
  $region28: #{encoder_forward.9} parent=0 // pred_region
    _
  $region29: #{encoder_forward.9} parent=0 // pred_fallthru
    _
  // Predicated region
  $region30: #{encoder_forward.9} parent=0 // pred_check
    _
  $region31: #{encoder_forward.9} parent=0 // pred_check_branch
    %246 = sbr.rel (0) target = $region33
  $region32: #{encoder_forward.9} parent=0 // pred_region
    _
  $region33: #{encoder_forward.9} parent=0 // pred_fallthru
    _

// kernel: encoder_forward.11
$region0: #{encoder_forward.11}
  #allocation0 [shape = 'u32[]', space=smem, size = 0x4, offset = 0x4, fixed_abs, tag = 'smem constant byte address 0x4 - core index']
  #allocation1 [shape = 'u32[144,128]{1,0:T(1,128)}', space=vmem, size = 0x12000, scoped, tag = 'internal scratch']
  %s0 = inlined_call_operand.vmem [shape: bf16[8,384], index: 0, kind: input, shape index: {}]
  %s1 = inlined_call_operand.vmem [shape: bf16[384,128], index: 1, kind: input, shape index: {}]
  %s2 = inlined_call_operand.vmem [shape: f32[8,128], index: 2, kind: output, shape index: {}]
  %s3 = sld [smem:[#allocation0]]
  $region18: #{encoder_forward.11} parent=0
    _
  %s5 = ssub.s32 1, %s3
  %s6 = scalar_select 0, %s5, %s3
  // Predicated region
  $region2: #{encoder_forward.11} parent=0 // pred_check
    _
  $region3: #{encoder_forward.11} parent=0 // pred_check_branch
    %8 = sbr.rel (0) target = $region5
  $region4: #{encoder_forward.11} parent=0 // pred_region
    _
  $region5: #{encoder_forward.11} parent=0 // pred_fallthru
    _
  // Predicated region
  $region6: #{encoder_forward.11} parent=0 // pred_check
    _
  $region7: #{encoder_forward.11} parent=0 // pred_check_branch
    %10 = sbr.rel (0) target = $region9
  $region8: #{encoder_forward.11} parent=0 // pred_region
    _
  $region9: #{encoder_forward.11} parent=0 // pred_fallthru
    _
  %v12 = vld [vmem:[%s0] sm:$0xff]
  %v13 = vld [vmem:[%s0 + $0x8] sm:$0xf]
  %v14 = vld [vmem:[%s1] sm:$0xf]
  %v15 = vld [vmem:[%s1 + $0x4] sm:$0xf]
  %v16 = vld [vmem:[%s1 + $0x8] sm:$0xf]
  %v17 = vld [vmem:[%s1 + $0xc] sm:$0xf]
  %v18 = vld [vmem:[%s1 + $0x10] sm:$0xf]
  %v19 = vld [vmem:[%s1 + $0x14] sm:$0xf]
  %v20 = vld [vmem:[%s1 + $0x18] sm:$0xf]
  %v21 = vld [vmem:[%s1 + $0x1c] sm:$0xf]
  %v22 = vld [vmem:[%s1 + $0x20] sm:$0xf]
  %v23 = vld [vmem:[%s1 + $0x24] sm:$0xf]
  %v24 = vld [vmem:[%s1 + $0x28] sm:$0xf]
  %v25 = vld [vmem:[%s1 + $0x2c] sm:$0xf]
  %v26 = vld [vmem:[%s1 + $0x30] sm:$0xf]
  %v27 = vld [vmem:[%s1 + $0x34] sm:$0xf]
  %v28 = vld [vmem:[%s1 + $0x38] sm:$0xf]
  %v29 = vld [vmem:[%s1 + $0x3c] sm:$0xf]
  %v30 = vld [vmem:[%s1 + $0x40] sm:$0xf]
  %v31 = vld [vmem:[%s1 + $0x44] sm:$0xf]
  %v32 = vld [vmem:[%s1 + $0x48] sm:$0xf]
  %v33 = vld [vmem:[%s1 + $0x4c] sm:$0xf]
  %v34 = vld [vmem:[%s1 + $0x50] sm:$0xf]
  %v35 = vld [vmem:[%s1 + $0x54] sm:$0xf]
  %v36 = vld [vmem:[%s1 + $0x58] sm:$0xf]
  %v37 = vld [vmem:[%s1 + $0x5c] sm:$0xf]
  %v38 = vld [vmem:[%s1 + $0x60] sm:$0xf]
  %v39 = vld [vmem:[%s1 + $0x64] sm:$0xf]
  %v40 = vld [vmem:[%s1 + $0x68] sm:$0xf]
  %v41 = vld [vmem:[%s1 + $0x6c] sm:$0xf]
  %v42 = vld [vmem:[%s1 + $0x70] sm:$0xf]
  %v43 = vld [vmem:[%s1 + $0x74] sm:$0xf]
  %v44 = vld [vmem:[%s1 + $0x78] sm:$0xf]
  %v45 = vld [vmem:[%s1 + $0x7c] sm:$0xf]
  %v46 = vld [vmem:[%s1 + $0x80] sm:$0xf]
  %v47 = vld [vmem:[%s1 + $0x84] sm:$0xf]
  %v48 = vld [vmem:[%s1 + $0x88] sm:$0xf]
  %v49 = vld [vmem:[%s1 + $0x8c] sm:$0xf]
  %v50 = vld [vmem:[%s1 + $0x90] sm:$0xf]
  %v51 = vld [vmem:[%s1 + $0x94] sm:$0xf]
  %v52 = vld [vmem:[%s1 + $0x98] sm:$0xf]
  %v53 = vld [vmem:[%s1 + $0x9c] sm:$0xf]
  %v54 = vld [vmem:[%s1 + $0xa0] sm:$0xf]
  %v55 = vld [vmem:[%s1 + $0xa4] sm:$0xf]
  %v56 = vld [vmem:[%s1 + $0xa8] sm:$0xf]
  %v57 = vld [vmem:[%s1 + $0xac] sm:$0xf]
  %v58 = vld [vmem:[%s1 + $0xb0] sm:$0xf]
  %v59 = vld [vmem:[%s1 + $0xb4] sm:$0xf]
  %v60 = vld [vmem:[%s1 + $0xb8] sm:$0xf]
  %v61 = vld [vmem:[%s1 + $0xbc] sm:$0xf]
  %v64 = vunpack.c.l.b16 %v12
  %v65 = vunpack.c.h.b16 %v12
  %v66 = vunpack.c.l.b16 %v13
  %v67 = vpack.c.b16 %v64, %v64
  %v68 = vpack.c.b16 %v65, %v65
  %v69 = vpack.c.b16 %v66, %v66
  %v121 = vunpack.c.l.b16 %v14
  %v122 = vunpack.c.l.b16 %v15
  %v123 = vunpack.c.l.b16 %v16
  %v124 = vunpack.c.l.b16 %v17
  %v125 = vunpack.c.l.b16 %v18
  %v126 = vunpack.c.l.b16 %v19
  %v127 = vunpack.c.l.b16 %v20
  %v128 = vunpack.c.l.b16 %v21
  %v129 = vunpack.c.l.b16 %v22
  %v130 = vunpack.c.l.b16 %v23
  %v131 = vunpack.c.l.b16 %v24
  %v132 = vunpack.c.l.b16 %v25
  %v133 = vunpack.c.l.b16 %v26
  %v134 = vunpack.c.l.b16 %v27
  %v135 = vunpack.c.l.b16 %v28
  %v136 = vunpack.c.l.b16 %v29
  %v137 = vunpack.c.l.b16 %v30
  %v138 = vunpack.c.l.b16 %v31
  %v139 = vunpack.c.l.b16 %v32
  %v140 = vunpack.c.l.b16 %v33
  %v141 = vunpack.c.l.b16 %v34
  %v142 = vunpack.c.l.b16 %v35
  %v143 = vunpack.c.l.b16 %v36
  %v144 = vunpack.c.l.b16 %v37
  %v145 = vunpack.c.l.b16 %v38
  %v146 = vunpack.c.l.b16 %v39
  %v147 = vunpack.c.l.b16 %v40
  %v148 = vunpack.c.l.b16 %v41
  %v149 = vunpack.c.l.b16 %v42
  %v150 = vunpack.c.l.b16 %v43
  %v151 = vunpack.c.l.b16 %v44
  %v152 = vunpack.c.l.b16 %v45
  %v153 = vunpack.c.l.b16 %v46
  %v154 = vunpack.c.l.b16 %v47
  %v155 = vunpack.c.l.b16 %v48
  %v156 = vunpack.c.l.b16 %v49
  %v157 = vunpack.c.l.b16 %v50
  %v158 = vunpack.c.l.b16 %v51
  %v159 = vunpack.c.l.b16 %v52
  %v160 = vunpack.c.l.b16 %v53
  %v161 = vunpack.c.l.b16 %v54
  %v162 = vunpack.c.l.b16 %v55
  %v163 = vunpack.c.l.b16 %v56
  %v164 = vunpack.c.l.b16 %v57
  %v165 = vunpack.c.l.b16 %v58
  %v166 = vunpack.c.l.b16 %v59
  %v167 = vunpack.c.l.b16 %v60
  %v168 = vunpack.c.l.b16 %v61
  %v169 = vpack.c.b16 %v122, %v121
  %v170 = vpack.c.b16 %v124, %v123
  %v171 = vpack.c.b16 %v126, %v125
  %v172 = vpack.c.b16 %v128, %v127
  %v173 = vpack.c.b16 %v130, %v129
  %v174 = vpack.c.b16 %v132, %v131
  %v175 = vpack.c.b16 %v134, %v133
  %v176 = vpack.c.b16 %v136, %v135
  %v177 = vpack.c.b16 %v138, %v137
  %v178 = vpack.c.b16 %v140, %v139
  %v179 = vpack.c.b16 %v142, %v141
  %v180 = vpack.c.b16 %v144, %v143
  %v181 = vpack.c.b16 %v146, %v145
  %v182 = vpack.c.b16 %v148, %v147
  %v183 = vpack.c.b16 %v150, %v149
  %v184 = vpack.c.b16 %v152, %v151
  %v185 = vpack.c.b16 %v154, %v153
  %v186 = vpack.c.b16 %v156, %v155
  %v187 = vpack.c.b16 %v158, %v157
  %v188 = vpack.c.b16 %v160, %v159
  %v189 = vpack.c.b16 %v162, %v161
  %v190 = vpack.c.b16 %v164, %v163
  %v191 = vpack.c.b16 %v166, %v165
  %v192 = vpack.c.b16 %v168, %v167
  %217 = vmatprep.subr.bf16.mxu0 0
  %218 = vmatpush1.bf16.msra.mxu0 %v169
  %219 = vmatprep.subr.bf16.mxu0 0
  %220 = vmatpush1.bf16.msra.mxu0 %v170
  %221 = vmatprep.subr.bf16.mxu0 0
  %222 = vmatpush1.bf16.msra.mxu0 %v171
  %223 = vmatprep.subr.bf16.mxu0 0
  %224 = vmatpush1.bf16.msra.mxu0 %v172
  %225 = vmatprep.subr.bf16.mxu0 0
  %226 = vmatpush1.bf16.msra.mxu0 %v173
  %227 = vmatprep.subr.bf16.mxu0 0
  %228 = vmatpush1.bf16.msra.mxu0 %v174
  %229 = vmatprep.subr.bf16.mxu0 0
  %230 = vmatpush1.bf16.msra.mxu0 %v175
  %231 = vmatprep.subr.bf16.mxu0 0
  %232 = vmatpush1.bf16.msra.mxu0 %v176
  %233 = vmatprep.subr.bf16.mxu0 0
  %234 = vmatpush1.bf16.msra.mxu0 %v177
  %235 = vmatprep.subr.bf16.mxu0 0
  %236 = vmatpush1.bf16.msra.mxu0 %v178
  %237 = vmatprep.subr.bf16.mxu0 0
  %238 = vmatpush1.bf16.msra.mxu0 %v179
  %239 = vmatprep.subr.bf16.mxu0 0
  %240 = vmatpush1.bf16.msra.mxu0 %v180
  %241 = vmatprep.subr.bf16.mxu0 0
  %242 = vmatpush1.bf16.msra.mxu0 %v181
  %243 = vmatprep.subr.bf16.mxu0 0
  %244 = vmatpush1.bf16.msra.mxu0 %v182
  %245 = vmatprep.subr.bf16.mxu0 0
  %246 = vmatpush1.bf16.msra.mxu0 %v183
  %247 = vmatprep.subr.bf16.mxu0 0
  %248 = vmatpush1.bf16.msra.mxu0 %v184
  %249 = vmatprep.mubr.bf16.mxu0 %v68
  %250 = vmatmul.mubr.bf16.gmra.mrb[0].mxu0 %v67
  %v251 = vpop.f32.mrb[0].mxu0
  %v252 = vadd.f32 0.0, %v251
  %v253 = vpop.f32.mrb[0].mxu0
  %v254 = vpop.f32.mrb[0].mxu0
  %v255 = vpop.f32.mrb[0].mxu0
  %256 = vdwg.mxu0
  %257 = vmatprep.subr.bf16.mxu0 0
  %258 = vmatpush1.bf16.msra.mxu0 %v185
  %259 = vmatprep.subr.bf16.mxu0 0
  %260 = vmatpush1.bf16.msra.mxu0 %v186
  %261 = vmatprep.subr.bf16.mxu0 0
  %262 = vmatpush1.bf16.msra.mxu0 %v187
  %263 = vmatprep.subr.bf16.mxu0 0
  %264 = vmatpush1.bf16.msra.mxu0 %v188
  %265 = vmatprep.subr.bf16.mxu0 0
  %266 = vmatpush1.bf16.msra.mxu0 %v189
  %267 = vmatprep.subr.bf16.mxu0 0
  %268 = vmatpush1.bf16.msra.mxu0 %v190
  %269 = vmatprep.subr.bf16.mxu0 0
  %270 = vmatpush1.bf16.msra.mxu0 %v191
  %271 = vmatprep.subr.bf16.mxu0 0
  %272 = vmatpush1.bf16.msra.mxu0 %v192
  %273 = vmatprep.subr.bf16.mxu0 0
  %274 = vmatpush1.bf16.msra.mxu0 0
  %275 = vmatprep.subr.bf16.mxu0 0
  %276 = vmatpush1.bf16.msra.mxu0 0
  %277 = vmatprep.subr.bf16.mxu0 0
  %278 = vmatpush1.bf16.msra.mxu0 0
  %279 = vmatprep.subr.bf16.mxu0 0
  %280 = vmatpush1.bf16.msra.mxu0 0
  %281 = vmatprep.subr.bf16.mxu0 0
  %282 = vmatpush1.bf16.msra.mxu0 0
  %283 = vmatprep.subr.bf16.mxu0 0
  %284 = vmatpush1.bf16.msra.mxu0 0
  %285 = vmatprep.subr.bf16.mxu0 0
  %286 = vmatpush1.bf16.msra.mxu0 0
  %287 = vmatprep.subr.bf16.mxu0 0
  %288 = vmatpush1.bf16.msra.mxu0 0
  %289 = vmatprep.mubr.bf16.mxu0 0
  %290 = vmatmul.mubr.bf16.gmra.mrb[0].mxu0 %v69
  %v291 = vpop.f32.mrb[0].mxu0
  %v292 = vadd.f32 %v252, %v291
  %v293 = vpop.f32.mrb[0].mxu0
  %v294 = vpop.f32.mrb[0].mxu0
  %v295 = vpop.f32.mrb[0].mxu0
  %296 = vdwg.mxu0
  %297 = vst [vmem:[%s2] sm:$0xff] %v292
  // Predicated region
  $region10: #{encoder_forward.11} parent=0 // pred_check
    _
  $region11: #{encoder_forward.11} parent=0 // pred_check_branch
    %299 = sbr.rel (0) target = $region13
  $region12: #{encoder_forward.11} parent=0 // pred_region
    _
  $region13: #{encoder_forward.11} parent=0 // pred_fallthru
    _
  // Predicated region
  $region14: #{encoder_forward.11} parent=0 // pred_check
    _
  $region15: #{encoder_forward.11} parent=0 // pred_check_branch
    %301 = sbr.rel (0) target = $region17
  $region16: #{encoder_forward.11} parent=0 // pred_region
    _
  $region17: #{encoder_forward.11} parent=0 // pred_fallthru
    _

</llo_original>
